<compile_context>
chip_gen: v6e
topology: v6e:2x2x1
jax: 0.10.0
libtpu: 0.0.40
codegen_flags: <defaults>
</compile_context>

<pallas_src>
import jax
import jax.numpy as jnp
from jax.experimental import pallas as pl
from jax.experimental.pallas import tpu as pltpu

INPUT_DIMS = 3 * 32 * 32   # 3072
HIDDEN_DIMS = 100
OUTPUT_DIMS = 10

HIDDEN_PAD = 128           # lane-aligned hidden width inside the kernel
OUTPUT_PAD = 128           # lane-aligned output width (keeps stores unmasked)
MAX_TILE_B = 1024          # batch tile rows (VMEM-checked below)
SUBLANE_B = 16             # batch-axis alignment (covers f32 8 / bf16 16 packing)
VMEM_LIMIT_BYTES = 32 * 1024 * 1024   # ~26 MiB actual footprint at TB=1024


def _mlp_kernel(x_ref, w1_ref, b1_ref, w2_ref, b2_ref, o_ref):
    # x:  (TB, 3072) f32      w1: (3072, 128) bf16    b1: (1, 128) f32
    # w2: (128, 128) bf16     b2: (1, 128) f32        o:  (TB, 128) bf16
    x_bf = x_ref[...].astype(jnp.bfloat16)                     # VPU cast, hidden under DMA
    h = jnp.dot(x_bf, w1_ref[...], preferred_element_type=jnp.float32)
    h = jnp.maximum(h + b1_ref[...], 0.0)                      # bias + ReLU in f32
    y = jnp.dot(h.astype(jnp.bfloat16), w2_ref[...],
                preferred_element_type=jnp.float32) + b2_ref[...]
    o_ref[...] = y.astype(o_ref.dtype)
    # TODO(synk): dropout is 0.0 in this config (identity at eval), omitted.


def prepare_params(w1, b1, w2, b2):
    """One-time weight padding / bf16 cast, hoisted out of the per-call forward."""
    w1_p = jnp.zeros((INPUT_DIMS, HIDDEN_PAD), jnp.bfloat16).at[:, :HIDDEN_DIMS].set(
        w1.astype(jnp.bfloat16))
    b1_p = jnp.zeros((1, HIDDEN_PAD), jnp.float32).at[0, :HIDDEN_DIMS].set(b1)
    w2_p = jnp.zeros((HIDDEN_PAD, OUTPUT_PAD), jnp.bfloat16).at[:HIDDEN_DIMS, :OUTPUT_DIMS].set(
        w2.astype(jnp.bfloat16))
    b2_p = jnp.zeros((1, OUTPUT_PAD), jnp.float32).at[0, :OUTPUT_DIMS].set(b2)
    return w1_p, b1_p, w2_p, b2_p


def _round_up(v, m):
    return ((v + m - 1) // m) * m


@jax.jit
def mlp_classifier_forward(x_nchw, w1_p, b1_p, w2_p, b2_p):
    """Forward pass.  x_nchw: (B, 3, 32, 32) f32 -> (B, 10) f32."""
    B = x_nchw.shape[0]
    x = x_nchw.reshape(B, -1)                                   # free view, stays f32

    # Batch tile: multiple of 16, capped at MAX_TILE_B, and clamped so that
    # n_tiles >= 2 whenever the batch allows it (keeps both v7x TCs busy).
    tb = min(MAX_TILE_B, _round_up(max(1, -(-B // 2)), SUBLANE_B))
    tb = max(tb, SUBLANE_B)
    n_tiles = pl.cdiv(B, tb)
    bp = n_tiles * tb                                           # padded output rows

    cost = pl.CostEstimate(
        flops=2 * B * INPUT_DIMS * HIDDEN_PAD + 2 * B * HIDDEN_PAD * OUTPUT_PAD,
        transcendentals=0,
        bytes_accessed=(B * INPUT_DIMS * 4             # x (f32)
                        + INPUT_DIMS * HIDDEN_PAD * 2   # w1 (bf16)
                        + HIDDEN_PAD * 4                # b1 (f32)
                        + HIDDEN_PAD * OUTPUT_PAD * 2   # w2 (bf16)
                        + OUTPUT_PAD * 4                # b2 (f32)
                        + bp * OUTPUT_PAD * 2),         # out (bf16)
    )

    resident = pl.Buffered(1)   # constant index_map -> no double-buffer needed

    out_p = pl.pallas_call(
        _mlp_kernel,
        out_shape=jax.ShapeDtypeStruct((bp, OUTPUT_PAD), jnp.bfloat16),
        grid_spec=pltpu.PrefetchScalarGridSpec(
            num_scalar_prefetch=0,
            grid=(n_tiles,),
            in_specs=[
                pl.BlockSpec((tb, INPUT_DIMS), lambda i: (i, 0)),       # x tile (f32)
                pl.BlockSpec((INPUT_DIMS, HIDDEN_PAD), lambda i: (0, 0),
                             pipeline_mode=resident),                   # w1 resident
                pl.BlockSpec((1, HIDDEN_PAD), lambda i: (0, 0),
                             pipeline_mode=resident),                   # b1 resident
                pl.BlockSpec((HIDDEN_PAD, OUTPUT_PAD), lambda i: (0, 0),
                             pipeline_mode=resident),                   # w2 resident
                pl.BlockSpec((1, OUTPUT_PAD), lambda i: (0, 0),
                             pipeline_mode=resident),                   # b2 resident
            ],
            out_specs=pl.BlockSpec((tb, OUTPUT_PAD), lambda i: (i, 0)),
        ),
        compiler_params=pltpu.CompilerParams(
            dimension_semantics=("parallel",),   # batch tiles independent (v7x 2 TCs)
            vmem_limit_bytes=VMEM_LIMIT_BYTES,
        ),
        cost_estimate=cost,
    )(x, w1_p, b1_p, w2_p, b2_p)

    return out_p[:B, :OUTPUT_DIMS].astype(jnp.float32)


def init_params(key):
    """Deterministic init matching nn.Linear's U(-1/sqrt(fan_in), 1/sqrt(fan_in))."""
    k1, k2, k3, k4 = jax.random.split(key, 4)
    lim1 = 1.0 / jnp.sqrt(float(INPUT_DIMS))
    lim2 = 1.0 / jnp.sqrt(float(HIDDEN_DIMS))
    w1 = jax.random.uniform(k1, (INPUT_DIMS, HIDDEN_DIMS), jnp.float32, -lim1, lim1)
    b1 = jax.random.uniform(k2, (HIDDEN_DIMS,), jnp.float32, -lim1, lim1)
    w2 = jax.random.uniform(k3, (HIDDEN_DIMS, OUTPUT_DIMS), jnp.float32, -lim2, lim2)
    b2 = jax.random.uniform(k4, (OUTPUT_DIMS,), jnp.float32, -lim2, lim2)
    return w1, b1, w2, b2


if __name__ == "__main__":
    key = jax.random.PRNGKey(0)
    k_x, k_p = jax.random.split(key)

    # small batch; spatial dims are fixed by the module (3x32x32 -> 3072 features)
    x = jax.random.normal(k_x, (2, 3, 32, 32), jnp.float32)
    w1, b1, w2, b2 = init_params(k_p)

    padded_params = prepare_params(w1, b1, w2, b2)   # one-time, outside the forward
    y = mlp_classifier_forward(x, *padded_params)
    y = jax.block_until_ready(y)

    # reference in plain JAX using the same bf16 quantization as the kernel
    x_flat = x.reshape(x.shape[0], -1)
    h_ref = jnp.dot(x_flat.astype(jnp.bfloat16), w1.astype(jnp.bfloat16),
                    preferred_element_type=jnp.float32) + b1
    h_ref = jnp.maximum(h_ref, 0.0)
    y_ref = jnp.dot(h_ref.astype(jnp.bfloat16), w2.astype(jnp.bfloat16),
                    preferred_element_type=jnp.float32) + b2

    assert y.shape == (2, 10), y.shape
    assert jnp.allclose(y, y_ref, atol=2e-2, rtol=2e-2), float(jnp.max(jnp.abs(y - y_ref)))

    print("KERNEL_OK")
</pallas_src>

<mosaic_0001>
module attributes {stable_mosaic.version = 11 : i64} {
  func.func @_mlp_kernel(%arg0: i32, %arg1: memref<16x3072xf32, #tpu.memory_space<vmem>>, %arg2: memref<3072x128xbf16, #tpu.memory_space<vmem>>, %arg3: memref<1x128xf32, #tpu.memory_space<vmem>>, %arg4: memref<128x128xbf16, #tpu.memory_space<vmem>>, %arg5: memref<1x128xf32, #tpu.memory_space<vmem>>, %arg6: memref<16x128xbf16, #tpu.memory_space<vmem>>) attributes {dimension_semantics = [#tpu.dimension_semantics<parallel>], iteration_bounds = array<i64: 1>, scalar_prefetch = 0 : i64, scratch_operands = 0 : i64, tpu.core_type = #tpu.core_type<tc>, window_params = [{transform_indices = @transform_0, window_bounds = array<i64: 16, 3072>}, {pipeline_mode = #tpu.pipeline_mode<synchronous>, transform_indices = @transform_1, window_bounds = array<i64: 3072, 128>}, {pipeline_mode = #tpu.pipeline_mode<synchronous>, transform_indices = @transform_2, window_bounds = array<i64: 1, 128>}, {pipeline_mode = #tpu.pipeline_mode<synchronous>, transform_indices = @transform_3, window_bounds = array<i64: 128, 128>}, {pipeline_mode = #tpu.pipeline_mode<synchronous>, transform_indices = @transform_4, window_bounds = array<i64: 1, 128>}, {transform_indices = @transform_5, window_bounds = array<i64: 16, 128>}]} {
    %c0 = arith.constant 0 : index
    %c0_0 = arith.constant 0 : index
    %0 = vector.load %arg1[%c0, %c0_0] : memref<16x3072xf32, #tpu.memory_space<vmem>>, vector<16x3072xf32>
    %1 = arith.truncf %0 : vector<16x3072xf32> to vector<16x3072xbf16>
    %c0_1 = arith.constant 0 : index
    %c0_2 = arith.constant 0 : index
    %2 = vector.load %arg2[%c0_1, %c0_2] : memref<3072x128xbf16, #tpu.memory_space<vmem>>, vector<3072x128xbf16>
    %cst = arith.constant dense<0.000000e+00> : vector<16x128xf32>
    %3 = tpu.matmul %1, %2, %cst {dimension_numbers = #tpu.dot_dimension_numbers<[1], [0], [0], [1], [0, 0, 1, 1], [], []>} : vector<16x3072xbf16>, vector<3072x128xbf16>, vector<16x128xf32> -> vector<16x128xf32>
    %c0_3 = arith.constant 0 : index
    %c0_4 = arith.constant 0 : index
    %4 = vector.load %arg3[%c0_3, %c0_4] : memref<1x128xf32, #tpu.memory_space<vmem>>, vector<1x128xf32>
    %5 = vector.broadcast %4 : vector<1x128xf32> to vector<16x128xf32>
    %6 = arith.addf %3, %5 : vector<16x128xf32>
    %cst_5 = arith.constant 0.000000e+00 : f32
    %7 = vector.broadcast %cst_5 : f32 to vector<16x128xf32>
    %8 = arith.maximumf %6, %7 : vector<16x128xf32>
    %9 = arith.truncf %8 : vector<16x128xf32> to vector<16x128xbf16>
    %c0_6 = arith.constant 0 : index
    %c0_7 = arith.constant 0 : index
    %10 = vector.load %arg4[%c0_6, %c0_7] : memref<128x128xbf16, #tpu.memory_space<vmem>>, vector<128x128xbf16>
    %cst_8 = arith.constant dense<0.000000e+00> : vector<16x128xf32>
    %11 = tpu.matmul %9, %10, %cst_8 {dimension_numbers = #tpu.dot_dimension_numbers<[1], [0], [0], [1], [0, 0, 1, 1], [], []>} : vector<16x128xbf16>, vector<128x128xbf16>, vector<16x128xf32> -> vector<16x128xf32>
    %c0_9 = arith.constant 0 : index
    %c0_10 = arith.constant 0 : index
    %12 = vector.load %arg5[%c0_9, %c0_10] : memref<1x128xf32, #tpu.memory_space<vmem>>, vector<1x128xf32>
    %13 = vector.broadcast %12 : vector<1x128xf32> to vector<16x128xf32>
    %14 = arith.addf %11, %13 : vector<16x128xf32>
    %15 = arith.truncf %14 : vector<16x128xf32> to vector<16x128xbf16>
    %c0_11 = arith.constant 0 : index
    %c0_12 = arith.constant 0 : index
    %16 = vector.load %arg6[%c0_11, %c0_12] : memref<16x128xbf16, #tpu.memory_space<vmem>>, vector<16x128xbf16>
    tpu.vector_store %arg6[%c0_11, %c0_12], %15 {strides = array<i32>} : memref<16x128xbf16, #tpu.memory_space<vmem>>, vector<16x128xbf16>,
    return
  }
  func.func @transform_0(%arg0: i32) -> (i32, i32) {
    %c0_i32 = arith.constant 0 : i32
    %c0_i32_0 = arith.constant 0 : i32
    return %arg0, %c0_i32 : i32, i32
  }
  func.func @transform_1(%arg0: i32) -> (i32, i32) {
    %c0_i32 = arith.constant 0 : i32
    %c0_i32_0 = arith.constant 0 : i32
    %c0_i32_1 = arith.constant 0 : i32
    return %c0_i32, %c0_i32_0 : i32, i32
  }
  func.func @transform_2(%arg0: i32) -> (i32, i32) {
    %c0_i32 = arith.constant 0 : i32
    %c0_i32_0 = arith.constant 0 : i32
    %c0_i32_1 = arith.constant 0 : i32
    return %c0_i32, %c0_i32_0 : i32, i32
  }
  func.func @transform_3(%arg0: i32) -> (i32, i32) {
    %c0_i32 = arith.constant 0 : i32
    %c0_i32_0 = arith.constant 0 : i32
    %c0_i32_1 = arith.constant 0 : i32
    return %c0_i32, %c0_i32_0 : i32, i32
  }
  func.func @transform_4(%arg0: i32) -> (i32, i32) {
    %c0_i32 = arith.constant 0 : i32
    %c0_i32_0 = arith.constant 0 : i32
    %c0_i32_1 = arith.constant 0 : i32
    return %c0_i32, %c0_i32_0 : i32, i32
  }
  func.func @transform_5(%arg0: i32) -> (i32, i32) {
    %c0_i32 = arith.constant 0 : i32
    %c0_i32_0 = arith.constant 0 : i32
    return %arg0, %c0_i32 : i32, i32
  }
}

</mosaic_0001>

<llo_original>
// kernel: mlp_classifier_forward.1
$region0: #{mlp_classifier_forward.1}
  #allocation0 [shape = 'u32[]', space=smem, size = 0x4, offset = 0x4, fixed_abs, tag = 'smem constant byte address 0x4 - core index']
  #allocation1 [shape = 'u32[144,128]{1,0:T(1,128)}', space=vmem, size = 0x12000, scoped, tag = 'internal scratch']
  %s0 = inlined_call_operand.vmem [shape: f32[2,3072], index: 0, kind: input, shape index: {}]
  %s1 = inlined_call_operand.hbm [shape: bf16[3072,128], index: 1, kind: input, shape index: {}]
  %s2 = inlined_call_operand.vmem [shape: f32[1,128], index: 2, kind: input, shape index: {}]
  %s3 = inlined_call_operand.vmem [shape: bf16[128,128], index: 3, kind: input, shape index: {}]
  %s4 = inlined_call_operand.vmem [shape: f32[1,128], index: 4, kind: input, shape index: {}]
  %s5 = inlined_call_operand.vmem [shape: bf16[16,128], index: 5, kind: output, shape index: {}]
  %s6 = sld [smem:[#allocation0]]
  $region34: #{mlp_classifier_forward.1} parent=0
    _
  %s8 = ssub.s32 1, %s6
  %s9 = scalar_select 0, %s8, %s6
  $region1: #{mlp_classifier_forward.1} parent=0
    #allocation2 [shape = 'u8[786432]{0}', space=vmem, size = 0xc0000, scoped, tag = 'input window, operand 1, single buffered']
    #allocation3 [shape = 's32[1]{0}', space=sflag, size = 0x4, scoped, tag = 'scoped memory for mlp_classifier_forward.1']
    %10 = vsyncpa [#allocation3], 0
    // Predicated region
    $region2: #{mlp_classifier_forward.1} parent=1 // pred_check
      _
    $region3: #{mlp_classifier_forward.1} parent=1 // pred_check_branch
      %12 = sbr.rel (0) target = $region5
    $region4: #{mlp_classifier_forward.1} parent=1 // pred_region
      _
    $region5: #{mlp_classifier_forward.1} parent=1 // pred_fallthru
      _
    // Predicated region
    $region6: #{mlp_classifier_forward.1} parent=1 // pred_check
      _
    $region7: #{mlp_classifier_forward.1} parent=1 // pred_check_branch
      %14 = sbr.rel (0) target = $region9
    $region8: #{mlp_classifier_forward.1} parent=1 // pred_region
      %s16 = ssub.s32 24576, 24576
      %17 = vsyncadd [#allocation3], %s16
      %s18 = sshll.u32 [#allocation2], 4
      %s19 = int_to_ptr.vmem [resolvable:$true] %s18
      %24 = dma.hbm_to_vmem [thread:$0]  %s1, 24576, %s19, [#allocation3], 64, 64, 4
    $region9: #{mlp_classifier_forward.1} parent=1 // pred_fallthru
      _
    // Predicated region
    $region10: #{mlp_classifier_forward.1} parent=1 // pred_check
      _
    $region11: #{mlp_classifier_forward.1} parent=1 // pred_check_branch
      %26 = sbr.rel (0) target = $region13
    $region12: #{mlp_classifier_forward.1} parent=1 // pred_region
      _
    $region13: #{mlp_classifier_forward.1} parent=1 // pred_fallthru
      _
    // Predicated region
    $region14: #{mlp_classifier_forward.1} parent=1 // pred_check
      _
    $region15: #{mlp_classifier_forward.1} parent=1 // pred_check_branch
      %28 = sbr.rel (0) target = $region17
    $region16: #{mlp_classifier_forward.1} parent=1 // pred_region
      _
    $region17: #{mlp_classifier_forward.1} parent=1 // pred_fallthru
      _
    // Predicated region
    $region18: #{mlp_classifier_forward.1} parent=1 // pred_check
      _
    $region19: #{mlp_classifier_forward.1} parent=1 // pred_check_branch
      %30 = sbr.rel (0) target = $region21
    $region20: #{mlp_classifier_forward.1} parent=1 // pred_region
      _
    $region21: #{mlp_classifier_forward.1} parent=1 // pred_fallthru
      _
    // Predicated region
    $region22: #{mlp_classifier_forward.1} parent=1 // pred_check
      _
    $region23: #{mlp_classifier_forward.1} parent=1 // pred_check_branch
      %32 = sbr.rel (0) target = $region25
    $region24: #{mlp_classifier_forward.1} parent=1 // pred_region
      %33 = dma.done [#allocation3], 24576
    $region25: #{mlp_classifier_forward.1} parent=1 // pred_fallthru
      _
    %v35 = vld [vmem:[%s0] sm:$0xff]
    %v36 = vld [vmem:[%s0 + $0x8] sm:$0xff]
    %v37 = vld [vmem:[%s0 + $0x10] sm:$0xff]
    %v38 = vld [vmem:[%s0 + $0x18] sm:$0xff]
    %v39 = vld [vmem:[%s0 + $0x20] sm:$0xff]
    %v40 = vld [vmem:[%s0 + $0x28] sm:$0xff]
    %v41 = vld [vmem:[%s0 + $0x30] sm:$0xff]
    %v42 = vld [vmem:[%s0 + $0x38] sm:$0xff]
    %v43 = vld [vmem:[%s0 + $0x40] sm:$0xff]
    %v44 = vld [vmem:[%s0 + $0x48] sm:$0xff]
    %v45 = vld [vmem:[%s0 + $0x50] sm:$0xff]
    %v46 = vld [vmem:[%s0 + $0x58] sm:$0xff]
    %v47 = vld [vmem:[%s0 + $0x60] sm:$0xff]
    %v48 = vld [vmem:[%s0 + $0x68] sm:$0xff]
    %v49 = vld [vmem:[%s0 + $0x70] sm:$0xff]
    %v50 = vld [vmem:[%s0 + $0x78] sm:$0xff]
    %v51 = vld [vmem:[%s0 + $0x80] sm:$0xff]
    %v52 = vld [vmem:[%s0 + $0x88] sm:$0xff]
    %v53 = vld [vmem:[%s0 + $0x90] sm:$0xff]
    %v54 = vld [vmem:[%s0 + $0x98] sm:$0xff]
    %v55 = vld [vmem:[%s0 + $0xa0] sm:$0xff]
    %v56 = vld [vmem:[%s0 + $0xa8] sm:$0xff]
    %v57 = vld [vmem:[%s0 + $0xb0] sm:$0xff]
    %v58 = vld [vmem:[%s0 + $0xb8] sm:$0xff]
    %v59 = vld [vmem:[%s0 + $0xc0] sm:$0xff]
    %v60 = vld [vmem:[%s0 + $0xc8] sm:$0xff]
    %v61 = vld [vmem:[%s0 + $0xd0] sm:$0xff]
    %v62 = vld [vmem:[%s0 + $0xd8] sm:$0xff]
    %v63 = vld [vmem:[%s0 + $0xe0] sm:$0xff]
    %v64 = vld [vmem:[%s0 + $0xe8] sm:$0xff]
    %v65 = vld [vmem:[%s0 + $0xf0] sm:$0xff]
    %v66 = vld [vmem:[%s0 + $0xf8] sm:$0xff]
    %v67 = vld [vmem:[%s0 + $0x100] sm:$0xff]
    %v68 = vld [vmem:[%s0 + $0x108] sm:$0xff]
    %v69 = vld [vmem:[%s0 + $0x110] sm:$0xff]
    %v70 = vld [vmem:[%s0 + $0x118] sm:$0xff]
    %v71 = vld [vmem:[%s0 + $0x120] sm:$0xff]
    %v72 = vld [vmem:[%s0 + $0x128] sm:$0xff]
    %v73 = vld [vmem:[%s0 + $0x130] sm:$0xff]
    %v74 = vld [vmem:[%s0 + $0x138] sm:$0xff]
    %v75 = vld [vmem:[%s0 + $0x140] sm:$0xff]
    %v76 = vld [vmem:[%s0 + $0x148] sm:$0xff]
    %v77 = vld [vmem:[%s0 + $0x150] sm:$0xff]
    %v78 = vld [vmem:[%s0 + $0x158] sm:$0xff]
    %v79 = vld [vmem:[%s0 + $0x160] sm:$0xff]
    %v80 = vld [vmem:[%s0 + $0x168] sm:$0xff]
    %v81 = vld [vmem:[%s0 + $0x170] sm:$0xff]
    %v82 = vld [vmem:[%s0 + $0x178] sm:$0xff]
    %v131 = vcombine.low %v35, %v41
    %v132 = vcombine.high %v35, %v41
    %v133 = vcombine.low %v47, %v53
    %v134 = vcombine.high %v47, %v53
    %v136 = vunpack.c.l.s4 1983009808
    %v137 = vunpack.c.0.s8 %v136
    %v138 = vlaneseq
    %v139 = vshrl.u32 %v138, 7
    %v140 = vsub.s32 %v137, %v139
    %v141 = vrot.slane %v131, %v140
    %v143 = vunpack.c.l.s4 1983009808
    %v144 = vunpack.c.0.s8 %v143
    %v145 = vlaneseq
    %v146 = vshrl.u32 %v145, 7
    %v147 = vsub.s32 %v144, %v146
    %v148 = vrot.slane %v132, %v147
    %v150 = vunpack.c.l.s4 1983009808
    %v151 = vunpack.c.0.s8 %v150
    %v152 = vlaneseq
    %v153 = vshrl.u32 %v152, 7
    %v154 = vsub.s32 %v151, %v153
    %v155 = vrot.slane %v133, %v154
    %v157 = vunpack.c.l.s4 1983009808
    %v158 = vunpack.c.0.s8 %v157
    %v159 = vlaneseq
    %v160 = vshrl.u32 %v159, 7
    %v161 = vsub.s32 %v158, %v160
    %v162 = vrot.slane %v134, %v161
    %v163 = vcombine.low %v141, %v155
    %v164 = vcombine.high %v141, %v155
    %v165 = vcombine.low %v148, %v162
    %v166 = vcombine.high %v148, %v162
    %v167 = vcombine.low %v36, %v42
    %v168 = vcombine.high %v36, %v42
    %v169 = vcombine.low %v48, %v54
    %v170 = vcombine.high %v48, %v54
    %v172 = vunpack.c.l.s4 1983009808
    %v173 = vunpack.c.0.s8 %v172
    %v174 = vlaneseq
    %v175 = vshrl.u32 %v174, 7
    %v176 = vsub.s32 %v173, %v175
    %v177 = vrot.slane %v167, %v176
    %v179 = vunpack.c.l.s4 1983009808
    %v180 = vunpack.c.0.s8 %v179
    %v181 = vlaneseq
    %v182 = vshrl.u32 %v181, 7
    %v183 = vsub.s32 %v180, %v182
    %v184 = vrot.slane %v168, %v183
    %v186 = vunpack.c.l.s4 1983009808
    %v187 = vunpack.c.0.s8 %v186
    %v188 = vlaneseq
    %v189 = vshrl.u32 %v188, 7
    %v190 = vsub.s32 %v187, %v189
    %v191 = vrot.slane %v169, %v190
    %v193 = vunpack.c.l.s4 1983009808
    %v194 = vunpack.c.0.s8 %v193
    %v195 = vlaneseq
    %v196 = vshrl.u32 %v195, 7
    %v197 = vsub.s32 %v194, %v196
    %v198 = vrot.slane %v170, %v197
    %v199 = vcombine.low %v177, %v191
    %v200 = vcombine.high %v177, %v191
    %v201 = vcombine.low %v184, %v198
    %v202 = vcombine.high %v184, %v198
    %v203 = vcombine.low %v37, %v43
    %v204 = vcombine.high %v37, %v43
    %v205 = vcombine.low %v49, %v55
    %v206 = vcombine.high %v49, %v55
    %v208 = vunpack.c.l.s4 1983009808
    %v209 = vunpack.c.0.s8 %v208
    %v210 = vlaneseq
    %v211 = vshrl.u32 %v210, 7
    %v212 = vsub.s32 %v209, %v211
    %v213 = vrot.slane %v203, %v212
    %v215 = vunpack.c.l.s4 1983009808
    %v216 = vunpack.c.0.s8 %v215
    %v217 = vlaneseq
    %v218 = vshrl.u32 %v217, 7
    %v219 = vsub.s32 %v216, %v218
    %v220 = vrot.slane %v204, %v219
    %v222 = vunpack.c.l.s4 1983009808
    %v223 = vunpack.c.0.s8 %v222
    %v224 = vlaneseq
    %v225 = vshrl.u32 %v224, 7
    %v226 = vsub.s32 %v223, %v225
    %v227 = vrot.slane %v205, %v226
    %v229 = vunpack.c.l.s4 1983009808
    %v230 = vunpack.c.0.s8 %v229
    %v231 = vlaneseq
    %v232 = vshrl.u32 %v231, 7
    %v233 = vsub.s32 %v230, %v232
    %v234 = vrot.slane %v206, %v233
    %v235 = vcombine.low %v213, %v227
    %v236 = vcombine.high %v213, %v227
    %v237 = vcombine.low %v220, %v234
    %v238 = vcombine.high %v220, %v234
    %v239 = vcombine.low %v38, %v44
    %v240 = vcombine.high %v38, %v44
    %v241 = vcombine.low %v50, %v56
    %v242 = vcombine.high %v50, %v56
    %v244 = vunpack.c.l.s4 1983009808
    %v245 = vunpack.c.0.s8 %v244
    %v246 = vlaneseq
    %v247 = vshrl.u32 %v246, 7
    %v248 = vsub.s32 %v245, %v247
    %v249 = vrot.slane %v239, %v248
    %v251 = vunpack.c.l.s4 1983009808
    %v252 = vunpack.c.0.s8 %v251
    %v253 = vlaneseq
    %v254 = vshrl.u32 %v253, 7
    %v255 = vsub.s32 %v252, %v254
    %v256 = vrot.slane %v240, %v255
    %v258 = vunpack.c.l.s4 1983009808
    %v259 = vunpack.c.0.s8 %v258
    %v260 = vlaneseq
    %v261 = vshrl.u32 %v260, 7
    %v262 = vsub.s32 %v259, %v261
    %v263 = vrot.slane %v241, %v262
    %v265 = vunpack.c.l.s4 1983009808
    %v266 = vunpack.c.0.s8 %v265
    %v267 = vlaneseq
    %v268 = vshrl.u32 %v267, 7
    %v269 = vsub.s32 %v266, %v268
    %v270 = vrot.slane %v242, %v269
    %v271 = vcombine.low %v249, %v263
    %v272 = vcombine.high %v249, %v263
    %v273 = vcombine.low %v256, %v270
    %v274 = vcombine.high %v256, %v270
    %v275 = vcombine.low %v39, %v45
    %v276 = vcombine.high %v39, %v45
    %v277 = vcombine.low %v51, %v57
    %v278 = vcombine.high %v51, %v57
    %v280 = vunpack.c.l.s4 1983009808
    %v281 = vunpack.c.0.s8 %v280
    %v282 = vlaneseq
    %v283 = vshrl.u32 %v282, 7
    %v284 = vsub.s32 %v281, %v283
    %v285 = vrot.slane %v275, %v284
    %v287 = vunpack.c.l.s4 1983009808
    %v288 = vunpack.c.0.s8 %v287
    %v289 = vlaneseq
    %v290 = vshrl.u32 %v289, 7
    %v291 = vsub.s32 %v288, %v290
    %v292 = vrot.slane %v276, %v291
    %v294 = vunpack.c.l.s4 1983009808
    %v295 = vunpack.c.0.s8 %v294
    %v296 = vlaneseq
    %v297 = vshrl.u32 %v296, 7
    %v298 = vsub.s32 %v295, %v297
    %v299 = vrot.slane %v277, %v298
    %v301 = vunpack.c.l.s4 1983009808
    %v302 = vunpack.c.0.s8 %v301
    %v303 = vlaneseq
    %v304 = vshrl.u32 %v303, 7
    %v305 = vsub.s32 %v302, %v304
    %v306 = vrot.slane %v278, %v305
    %v307 = vcombine.low %v285, %v299
    %v308 = vcombine.high %v285, %v299
    %v309 = vcombine.low %v292, %v306
    %v310 = vcombine.high %v292, %v306
    %v311 = vcombine.low %v40, %v46
    %v312 = vcombine.high %v40, %v46
    %v313 = vcombine.low %v52, %v58
    %v314 = vcombine.high %v52, %v58
    %v316 = vunpack.c.l.s4 1983009808
    %v317 = vunpack.c.0.s8 %v316
    %v318 = vlaneseq
    %v319 = vshrl.u32 %v318, 7
    %v320 = vsub.s32 %v317, %v319
    %v321 = vrot.slane %v311, %v320
    %v323 = vunpack.c.l.s4 1983009808
    %v324 = vunpack.c.0.s8 %v323
    %v325 = vlaneseq
    %v326 = vshrl.u32 %v325, 7
    %v327 = vsub.s32 %v324, %v326
    %v328 = vrot.slane %v312, %v327
    %v330 = vunpack.c.l.s4 1983009808
    %v331 = vunpack.c.0.s8 %v330
    %v332 = vlaneseq
    %v333 = vshrl.u32 %v332, 7
    %v334 = vsub.s32 %v331, %v333
    %v335 = vrot.slane %v313, %v334
    %v337 = vunpack.c.l.s4 1983009808
    %v338 = vunpack.c.0.s8 %v337
    %v339 = vlaneseq
    %v340 = vshrl.u32 %v339, 7
    %v341 = vsub.s32 %v338, %v340
    %v342 = vrot.slane %v314, %v341
    %v343 = vcombine.low %v321, %v335
    %v344 = vcombine.high %v321, %v335
    %v345 = vcombine.low %v328, %v342
    %v346 = vcombine.high %v328, %v342
    %v347 = vcombine.low %v59, %v65
    %v348 = vcombine.high %v59, %v65
    %v349 = vcombine.low %v71, %v77
    %v350 = vcombine.high %v71, %v77
    %v352 = vunpack.c.l.s4 1983009808
    %v353 = vunpack.c.0.s8 %v352
    %v354 = vlaneseq
    %v355 = vshrl.u32 %v354, 7
    %v356 = vsub.s32 %v353, %v355
    %v357 = vrot.slane %v347, %v356
    %v359 = vunpack.c.l.s4 1983009808
    %v360 = vunpack.c.0.s8 %v359
    %v361 = vlaneseq
    %v362 = vshrl.u32 %v361, 7
    %v363 = vsub.s32 %v360, %v362
    %v364 = vrot.slane %v348, %v363
    %v366 = vunpack.c.l.s4 1983009808
    %v367 = vunpack.c.0.s8 %v366
    %v368 = vlaneseq
    %v369 = vshrl.u32 %v368, 7
    %v370 = vsub.s32 %v367, %v369
    %v371 = vrot.slane %v349, %v370
    %v373 = vunpack.c.l.s4 1983009808
    %v374 = vunpack.c.0.s8 %v373
    %v375 = vlaneseq
    %v376 = vshrl.u32 %v375, 7
    %v377 = vsub.s32 %v374, %v376
    %v378 = vrot.slane %v350, %v377
    %v379 = vcombine.low %v357, %v371
    %v380 = vcombine.high %v357, %v371
    %v381 = vcombine.low %v364, %v378
    %v382 = vcombine.high %v364, %v378
    %v383 = vcombine.low %v60, %v66
    %v384 = vcombine.high %v60, %v66
    %v385 = vcombine.low %v72, %v78
    %v386 = vcombine.high %v72, %v78
    %v388 = vunpack.c.l.s4 1983009808
    %v389 = vunpack.c.0.s8 %v388
    %v390 = vlaneseq
    %v391 = vshrl.u32 %v390, 7
    %v392 = vsub.s32 %v389, %v391
    %v393 = vrot.slane %v383, %v392
    %v395 = vunpack.c.l.s4 1983009808
    %v396 = vunpack.c.0.s8 %v395
    %v397 = vlaneseq
    %v398 = vshrl.u32 %v397, 7
    %v399 = vsub.s32 %v396, %v398
    %v400 = vrot.slane %v384, %v399
    %v402 = vunpack.c.l.s4 1983009808
    %v403 = vunpack.c.0.s8 %v402
    %v404 = vlaneseq
    %v405 = vshrl.u32 %v404, 7
    %v406 = vsub.s32 %v403, %v405
    %v407 = vrot.slane %v385, %v406
    %v409 = vunpack.c.l.s4 1983009808
    %v410 = vunpack.c.0.s8 %v409
    %v411 = vlaneseq
    %v412 = vshrl.u32 %v411, 7
    %v413 = vsub.s32 %v410, %v412
    %v414 = vrot.slane %v386, %v413
    %v415 = vcombine.low %v393, %v407
    %v416 = vcombine.high %v393, %v407
    %v417 = vcombine.low %v400, %v414
    %v418 = vcombine.high %v400, %v414
    %v419 = vcombine.low %v61, %v67
    %v420 = vcombine.high %v61, %v67
    %v421 = vcombine.low %v73, %v79
    %v422 = vcombine.high %v73, %v79
    %v424 = vunpack.c.l.s4 1983009808
    %v425 = vunpack.c.0.s8 %v424
    %v426 = vlaneseq
    %v427 = vshrl.u32 %v426, 7
    %v428 = vsub.s32 %v425, %v427
    %v429 = vrot.slane %v419, %v428
    %v431 = vunpack.c.l.s4 1983009808
    %v432 = vunpack.c.0.s8 %v431
    %v433 = vlaneseq
    %v434 = vshrl.u32 %v433, 7
    %v435 = vsub.s32 %v432, %v434
    %v436 = vrot.slane %v420, %v435
    %v438 = vunpack.c.l.s4 1983009808
    %v439 = vunpack.c.0.s8 %v438
    %v440 = vlaneseq
    %v441 = vshrl.u32 %v440, 7
    %v442 = vsub.s32 %v439, %v441
    %v443 = vrot.slane %v421, %v442
    %v445 = vunpack.c.l.s4 1983009808
    %v446 = vunpack.c.0.s8 %v445
    %v447 = vlaneseq
    %v448 = vshrl.u32 %v447, 7
    %v449 = vsub.s32 %v446, %v448
    %v450 = vrot.slane %v422, %v449
    %v451 = vcombine.low %v429, %v443
    %v452 = vcombine.high %v429, %v443
    %v453 = vcombine.low %v436, %v450
    %v454 = vcombine.high %v436, %v450
    %v455 = vcombine.low %v62, %v68
    %v456 = vcombine.high %v62, %v68
    %v457 = vcombine.low %v74, %v80
    %v458 = vcombine.high %v74, %v80
    %v460 = vunpack.c.l.s4 1983009808
    %v461 = vunpack.c.0.s8 %v460
    %v462 = vlaneseq
    %v463 = vshrl.u32 %v462, 7
    %v464 = vsub.s32 %v461, %v463
    %v465 = vrot.slane %v455, %v464
    %v467 = vunpack.c.l.s4 1983009808
    %v468 = vunpack.c.0.s8 %v467
    %v469 = vlaneseq
    %v470 = vshrl.u32 %v469, 7
    %v471 = vsub.s32 %v468, %v470
    %v472 = vrot.slane %v456, %v471
    %v474 = vunpack.c.l.s4 1983009808
    %v475 = vunpack.c.0.s8 %v474
    %v476 = vlaneseq
    %v477 = vshrl.u32 %v476, 7
    %v478 = vsub.s32 %v475, %v477
    %v479 = vrot.slane %v457, %v478
    %v481 = vunpack.c.l.s4 1983009808
    %v482 = vunpack.c.0.s8 %v481
    %v483 = vlaneseq
    %v484 = vshrl.u32 %v483, 7
    %v485 = vsub.s32 %v482, %v484
    %v486 = vrot.slane %v458, %v485
    %v487 = vcombine.low %v465, %v479
    %v488 = vcombine.high %v465, %v479
    %v489 = vcombine.low %v472, %v486
    %v490 = vcombine.high %v472, %v486
    %v491 = vcombine.low %v63, %v69
    %v492 = vcombine.high %v63, %v69
    %v493 = vcombine.low %v75, %v81
    %v494 = vcombine.high %v75, %v81
    %v496 = vunpack.c.l.s4 1983009808
    %v497 = vunpack.c.0.s8 %v496
    %v498 = vlaneseq
    %v499 = vshrl.u32 %v498, 7
    %v500 = vsub.s32 %v497, %v499
    %v501 = vrot.slane %v491, %v500
    %v503 = vunpack.c.l.s4 1983009808
    %v504 = vunpack.c.0.s8 %v503
    %v505 = vlaneseq
    %v506 = vshrl.u32 %v505, 7
    %v507 = vsub.s32 %v504, %v506
    %v508 = vrot.slane %v492, %v507
    %v510 = vunpack.c.l.s4 1983009808
    %v511 = vunpack.c.0.s8 %v510
    %v512 = vlaneseq
    %v513 = vshrl.u32 %v512, 7
    %v514 = vsub.s32 %v511, %v513
    %v515 = vrot.slane %v493, %v514
    %v517 = vunpack.c.l.s4 1983009808
    %v518 = vunpack.c.0.s8 %v517
    %v519 = vlaneseq
    %v520 = vshrl.u32 %v519, 7
    %v521 = vsub.s32 %v518, %v520
    %v522 = vrot.slane %v494, %v521
    %v523 = vcombine.low %v501, %v515
    %v524 = vcombine.high %v501, %v515
    %v525 = vcombine.low %v508, %v522
    %v526 = vcombine.high %v508, %v522
    %v527 = vcombine.low %v64, %v70
    %v528 = vcombine.high %v64, %v70
    %v529 = vcombine.low %v76, %v82
    %v530 = vcombine.high %v76, %v82
    %v532 = vunpack.c.l.s4 1983009808
    %v533 = vunpack.c.0.s8 %v532
    %v534 = vlaneseq
    %v535 = vshrl.u32 %v534, 7
    %v536 = vsub.s32 %v533, %v535
    %v537 = vrot.slane %v527, %v536
    %v539 = vunpack.c.l.s4 1983009808
    %v540 = vunpack.c.0.s8 %v539
    %v541 = vlaneseq
    %v542 = vshrl.u32 %v541, 7
    %v543 = vsub.s32 %v540, %v542
    %v544 = vrot.slane %v528, %v543
    %v546 = vunpack.c.l.s4 1983009808
    %v547 = vunpack.c.0.s8 %v546
    %v548 = vlaneseq
    %v549 = vshrl.u32 %v548, 7
    %v550 = vsub.s32 %v547, %v549
    %v551 = vrot.slane %v529, %v550
    %v553 = vunpack.c.l.s4 1983009808
    %v554 = vunpack.c.0.s8 %v553
    %v555 = vlaneseq
    %v556 = vshrl.u32 %v555, 7
    %v557 = vsub.s32 %v554, %v556
    %v558 = vrot.slane %v530, %v557
    %v559 = vcombine.low %v537, %v551
    %v560 = vcombine.high %v537, %v551
    %v561 = vcombine.low %v544, %v558
    %v562 = vcombine.high %v544, %v558
    %v611 = vpack.c.bf16 %v379, %v163
    %v612 = vpack.c.bf16 %v380, %v164
    %v613 = vpack.c.bf16 %v381, %v165
    %v614 = vpack.c.bf16 %v382, %v166
    %v615 = vpack.c.bf16 %v415, %v199
    %v616 = vpack.c.bf16 %v416, %v200
    %v617 = vpack.c.bf16 %v417, %v201
    %v618 = vpack.c.bf16 %v418, %v202
    %v619 = vpack.c.bf16 %v451, %v235
    %v620 = vpack.c.bf16 %v452, %v236
    %v621 = vpack.c.bf16 %v453, %v237
    %v622 = vpack.c.bf16 %v454, %v238
    %v623 = vpack.c.bf16 %v487, %v271
    %v624 = vpack.c.bf16 %v488, %v272
    %v625 = vpack.c.bf16 %v489, %v273
    %v626 = vpack.c.bf16 %v490, %v274
    %v627 = vpack.c.bf16 %v523, %v307
    %v628 = vpack.c.bf16 %v524, %v308
    %v629 = vpack.c.bf16 %v525, %v309
    %v630 = vpack.c.bf16 %v526, %v310
    %v631 = vpack.c.bf16 %v559, %v343
    %v632 = vpack.c.bf16 %v560, %v344
    %v633 = vpack.c.bf16 %v561, %v345
    %v634 = vpack.c.bf16 %v562, %v346
    %v635 = vld [vmem:[#allocation2] sm:$0xf]
    %v636 = vld [vmem:[#allocation2 + $0x4] sm:$0xf]
    %v637 = vld [vmem:[#allocation2 + $0x8] sm:$0xf]
    %v638 = vld [vmem:[#allocation2 + $0xc] sm:$0xf]
    %v639 = vld [vmem:[#allocation2 + $0x10] sm:$0xf]
    %v640 = vld [vmem:[#allocation2 + $0x14] sm:$0xf]
    %v641 = vld [vmem:[#allocation2 + $0x18] sm:$0xf]
    %v642 = vld [vmem:[#allocation2 + $0x1c] sm:$0xf]
    %v643 = vld [vmem:[#allocation2 + $0x20] sm:$0xf]
    %v644 = vld [vmem:[#allocation2 + $0x24] sm:$0xf]
    %v645 = vld [vmem:[#allocation2 + $0x28] sm:$0xf]
    %v646 = vld [vmem:[#allocation2 + $0x2c] sm:$0xf]
    %v647 = vld [vmem:[#allocation2 + $0x30] sm:$0xf]
    %v648 = vld [vmem:[#allocation2 + $0x34] sm:$0xf]
    %v649 = vld [vmem:[#allocation2 + $0x38] sm:$0xf]
    %v650 = vld [vmem:[#allocation2 + $0x3c] sm:$0xf]
    %v651 = vld [vmem:[#allocation2 + $0x40] sm:$0xf]
    %v652 = vld [vmem:[#allocation2 + $0x44] sm:$0xf]
    %v653 = vld [vmem:[#allocation2 + $0x48] sm:$0xf]
    %v654 = vld [vmem:[#allocation2 + $0x4c] sm:$0xf]
    %v655 = vld [vmem:[#allocation2 + $0x50] sm:$0xf]
    %v656 = vld [vmem:[#allocation2 + $0x54] sm:$0xf]
    %v657 = vld [vmem:[#allocation2 + $0x58] sm:$0xf]
    %v658 = vld [vmem:[#allocation2 + $0x5c] sm:$0xf]
    %v659 = vld [vmem:[#allocation2 + $0x60] sm:$0xf]
    %v660 = vld [vmem:[#allocation2 + $0x64] sm:$0xf]
    %v661 = vld [vmem:[#allocation2 + $0x68] sm:$0xf]
    %v662 = vld [vmem:[#allocation2 + $0x6c] sm:$0xf]
    %v663 = vld [vmem:[#allocation2 + $0x70] sm:$0xf]
    %v664 = vld [vmem:[#allocation2 + $0x74] sm:$0xf]
    %v665 = vld [vmem:[#allocation2 + $0x78] sm:$0xf]
    %v666 = vld [vmem:[#allocation2 + $0x7c] sm:$0xf]
    %v667 = vld [vmem:[#allocation2 + $0x80] sm:$0xf]
    %v668 = vld [vmem:[#allocation2 + $0x84] sm:$0xf]
    %v669 = vld [vmem:[#allocation2 + $0x88] sm:$0xf]
    %v670 = vld [vmem:[#allocation2 + $0x8c] sm:$0xf]
    %v671 = vld [vmem:[#allocation2 + $0x90] sm:$0xf]
    %v672 = vld [vmem:[#allocation2 + $0x94] sm:$0xf]
    %v673 = vld [vmem:[#allocation2 + $0x98] sm:$0xf]
    %v674 = vld [vmem:[#allocation2 + $0x9c] sm:$0xf]
    %v675 = vld [vmem:[#allocation2 + $0xa0] sm:$0xf]
    %v676 = vld [vmem:[#allocation2 + $0xa4] sm:$0xf]
    %v677 = vld [vmem:[#allocation2 + $0xa8] sm:$0xf]
    %v678 = vld [vmem:[#allocation2 + $0xac] sm:$0xf]
    %v679 = vld [vmem:[#allocation2 + $0xb0] sm:$0xf]
    %v680 = vld [vmem:[#allocation2 + $0xb4] sm:$0xf]
    %v681 = vld [vmem:[#allocation2 + $0xb8] sm:$0xf]
    %v682 = vld [vmem:[#allocation2 + $0xbc] sm:$0xf]
    %v683 = vld [vmem:[#allocation2 + $0xc0] sm:$0xf]
    %v684 = vld [vmem:[#allocation2 + $0xc4] sm:$0xf]
    %v685 = vld [vmem:[#allocation2 + $0xc8] sm:$0xf]
    %v686 = vld [vmem:[#allocation2 + $0xcc] sm:$0xf]
    %v687 = vld [vmem:[#allocation2 + $0xd0] sm:$0xf]
    %v688 = vld [vmem:[#allocation2 + $0xd4] sm:$0xf]
    %v689 = vld [vmem:[#allocation2 + $0xd8] sm:$0xf]
    %v690 = vld [vmem:[#allocation2 + $0xdc] sm:$0xf]
    %v691 = vld [vmem:[#allocation2 + $0xe0] sm:$0xf]
    %v692 = vld [vmem:[#allocation2 + $0xe4] sm:$0xf]
    %v693 = vld [vmem:[#allocation2 + $0xe8] sm:$0xf]
    %v694 = vld [vmem:[#allocation2 + $0xec] sm:$0xf]
    %v695 = vld [vmem:[#allocation2 + $0xf0] sm:$0xf]
    %v696 = vld [vmem:[#allocation2 + $0xf4] sm:$0xf]
    %v697 = vld [vmem:[#allocation2 + $0xf8] sm:$0xf]
    %v698 = vld [vmem:[#allocation2 + $0xfc] sm:$0xf]
    %v699 = vld [vmem:[#allocation2 + $0x100] sm:$0xf]
    %v700 = vld [vmem:[#allocation2 + $0x104] sm:$0xf]
    %v701 = vld [vmem:[#allocation2 + $0x108] sm:$0xf]
    %v702 = vld [vmem:[#allocation2 + $0x10c] sm:$0xf]
    %v703 = vld [vmem:[#allocation2 + $0x110] sm:$0xf]
    %v704 = vld [vmem:[#allocation2 + $0x114] sm:$0xf]
    %v705 = vld [vmem:[#allocation2 + $0x118] sm:$0xf]
    %v706 = vld [vmem:[#allocation2 + $0x11c] sm:$0xf]
    %v707 = vld [vmem:[#allocation2 + $0x120] sm:$0xf]
    %v708 = vld [vmem:[#allocation2 + $0x124] sm:$0xf]
    %v709 = vld [vmem:[#allocation2 + $0x128] sm:$0xf]
    %v710 = vld [vmem:[#allocation2 + $0x12c] sm:$0xf]
    %v711 = vld [vmem:[#allocation2 + $0x130] sm:$0xf]
    %v712 = vld [vmem:[#allocation2 + $0x134] sm:$0xf]
    %v713 = vld [vmem:[#allocation2 + $0x138] sm:$0xf]
    %v714 = vld [vmem:[#allocation2 + $0x13c] sm:$0xf]
    %v715 = vld [vmem:[#allocation2 + $0x140] sm:$0xf]
    %v716 = vld [vmem:[#allocation2 + $0x144] sm:$0xf]
    %v717 = vld [vmem:[#allocation2 + $0x148] sm:$0xf]
    %v718 = vld [vmem:[#allocation2 + $0x14c] sm:$0xf]
    %v719 = vld [vmem:[#allocation2 + $0x150] sm:$0xf]
    %v720 = vld [vmem:[#allocation2 + $0x154] sm:$0xf]
    %v721 = vld [vmem:[#allocation2 + $0x158] sm:$0xf]
    %v722 = vld [vmem:[#allocation2 + $0x15c] sm:$0xf]
    %v723 = vld [vmem:[#allocation2 + $0x160] sm:$0xf]
    %v724 = vld [vmem:[#allocation2 + $0x164] sm:$0xf]
    %v725 = vld [vmem:[#allocation2 + $0x168] sm:$0xf]
    %v726 = vld [vmem:[#allocation2 + $0x16c] sm:$0xf]
    %v727 = vld [vmem:[#allocation2 + $0x170] sm:$0xf]
    %v728 = vld [vmem:[#allocation2 + $0x174] sm:$0xf]
    %v729 = vld [vmem:[#allocation2 + $0x178] sm:$0xf]
    %v730 = vld [vmem:[#allocation2 + $0x17c] sm:$0xf]
    %v731 = vld [vmem:[#allocation2 + $0x180] sm:$0xf]
    %v732 = vld [vmem:[#allocation2 + $0x184] sm:$0xf]
    %v733 = vld [vmem:[#allocation2 + $0x188] sm:$0xf]
    %v734 = vld [vmem:[#allocation2 + $0x18c] sm:$0xf]
    %v735 = vld [vmem:[#allocation2 + $0x190] sm:$0xf]
    %v736 = vld [vmem:[#allocation2 + $0x194] sm:$0xf]
    %v737 = vld [vmem:[#allocation2 + $0x198] sm:$0xf]
    %v738 = vld [vmem:[#allocation2 + $0x19c] sm:$0xf]
    %v739 = vld [vmem:[#allocation2 + $0x1a0] sm:$0xf]
    %v740 = vld [vmem:[#allocation2 + $0x1a4] sm:$0xf]
    %v741 = vld [vmem:[#allocation2 + $0x1a8] sm:$0xf]
    %v742 = vld [vmem:[#allocation2 + $0x1ac] sm:$0xf]
    %v743 = vld [vmem:[#allocation2 + $0x1b0] sm:$0xf]
    %v744 = vld [vmem:[#allocation2 + $0x1b4] sm:$0xf]
    %v745 = vld [vmem:[#allocation2 + $0x1b8] sm:$0xf]
    %v746 = vld [vmem:[#allocation2 + $0x1bc] sm:$0xf]
    %v747 = vld [vmem:[#allocation2 + $0x1c0] sm:$0xf]
    %v748 = vld [vmem:[#allocation2 + $0x1c4] sm:$0xf]
    %v749 = vld [vmem:[#allocation2 + $0x1c8] sm:$0xf]
    %v750 = vld [vmem:[#allocation2 + $0x1cc] sm:$0xf]
    %v751 = vld [vmem:[#allocation2 + $0x1d0] sm:$0xf]
    %v752 = vld [vmem:[#allocation2 + $0x1d4] sm:$0xf]
    %v753 = vld [vmem:[#allocation2 + $0x1d8] sm:$0xf]
    %v754 = vld [vmem:[#allocation2 + $0x1dc] sm:$0xf]
    %v755 = vld [vmem:[#allocation2 + $0x1e0] sm:$0xf]
    %v756 = vld [vmem:[#allocation2 + $0x1e4] sm:$0xf]
    %v757 = vld [vmem:[#allocation2 + $0x1e8] sm:$0xf]
    %v758 = vld [vmem:[#allocation2 + $0x1ec] sm:$0xf]
    %v759 = vld [vmem:[#allocation2 + $0x1f0] sm:$0xf]
    %v760 = vld [vmem:[#allocation2 + $0x1f4] sm:$0xf]
    %v761 = vld [vmem:[#allocation2 + $0x1f8] sm:$0xf]
    %v762 = vld [vmem:[#allocation2 + $0x1fc] sm:$0xf]
    %v763 = vld [vmem:[#allocation2 + $0x200] sm:$0xf]
    %v764 = vld [vmem:[#allocation2 + $0x204] sm:$0xf]
    %v765 = vld [vmem:[#allocation2 + $0x208] sm:$0xf]
    %v766 = vld [vmem:[#allocation2 + $0x20c] sm:$0xf]
    %v767 = vld [vmem:[#allocation2 + $0x210] sm:$0xf]
    %v768 = vld [vmem:[#allocation2 + $0x214] sm:$0xf]
    %v769 = vld [vmem:[#allocation2 + $0x218] sm:$0xf]
    %v770 = vld [vmem:[#allocation2 + $0x21c] sm:$0xf]
    %v771 = vld [vmem:[#allocation2 + $0x220] sm:$0xf]
    %v772 = vld [vmem:[#allocation2 + $0x224] sm:$0xf]
    %v773 = vld [vmem:[#allocation2 + $0x228] sm:$0xf]
    %v774 = vld [vmem:[#allocation2 + $0x22c] sm:$0xf]
    %v775 = vld [vmem:[#allocation2 + $0x230] sm:$0xf]
    %v776 = vld [vmem:[#allocation2 + $0x234] sm:$0xf]
    %v777 = vld [vmem:[#allocation2 + $0x238] sm:$0xf]
    %v778 = vld [vmem:[#allocation2 + $0x23c] sm:$0xf]
    %v779 = vld [vmem:[#allocation2 + $0x240] sm:$0xf]
    %v780 = vld [vmem:[#allocation2 + $0x244] sm:$0xf]
    %v781 = vld [vmem:[#allocation2 + $0x248] sm:$0xf]
    %v782 = vld [vmem:[#allocation2 + $0x24c] sm:$0xf]
    %v783 = vld [vmem:[#allocation2 + $0x250] sm:$0xf]
    %v784 = vld [vmem:[#allocation2 + $0x254] sm:$0xf]
    %v785 = vld [vmem:[#allocation2 + $0x258] sm:$0xf]
    %v786 = vld [vmem:[#allocation2 + $0x25c] sm:$0xf]
    %v787 = vld [vmem:[#allocation2 + $0x260] sm:$0xf]
    %v788 = vld [vmem:[#allocation2 + $0x264] sm:$0xf]
    %v789 = vld [vmem:[#allocation2 + $0x268] sm:$0xf]
    %v790 = vld [vmem:[#allocation2 + $0x26c] sm:$0xf]
    %v791 = vld [vmem:[#allocation2 + $0x270] sm:$0xf]
    %v792 = vld [vmem:[#allocation2 + $0x274] sm:$0xf]
    %v793 = vld [vmem:[#allocation2 + $0x278] sm:$0xf]
    %v794 = vld [vmem:[#allocation2 + $0x27c] sm:$0xf]
    %v795 = vld [vmem:[#allocation2 + $0x280] sm:$0xf]
    %v796 = vld [vmem:[#allocation2 + $0x284] sm:$0xf]
    %v797 = vld [vmem:[#allocation2 + $0x288] sm:$0xf]
    %v798 = vld [vmem:[#allocation2 + $0x28c] sm:$0xf]
    %v799 = vld [vmem:[#allocation2 + $0x290] sm:$0xf]
    %v800 = vld [vmem:[#allocation2 + $0x294] sm:$0xf]
    %v801 = vld [vmem:[#allocation2 + $0x298] sm:$0xf]
    %v802 = vld [vmem:[#allocation2 + $0x29c] sm:$0xf]
    %v803 = vld [vmem:[#allocation2 + $0x2a0] sm:$0xf]
    %v804 = vld [vmem:[#allocation2 + $0x2a4] sm:$0xf]
    %v805 = vld [vmem:[#allocation2 + $0x2a8] sm:$0xf]
    %v806 = vld [vmem:[#allocation2 + $0x2ac] sm:$0xf]
    %v807 = vld [vmem:[#allocation2 + $0x2b0] sm:$0xf]
    %v808 = vld [vmem:[#allocation2 + $0x2b4] sm:$0xf]
    %v809 = vld [vmem:[#allocation2 + $0x2b8] sm:$0xf]
    %v810 = vld [vmem:[#allocation2 + $0x2bc] sm:$0xf]
    %v811 = vld [vmem:[#allocation2 + $0x2c0] sm:$0xf]
    %v812 = vld [vmem:[#allocation2 + $0x2c4] sm:$0xf]
    %v813 = vld [vmem:[#allocation2 + $0x2c8] sm:$0xf]
    %v814 = vld [vmem:[#allocation2 + $0x2cc] sm:$0xf]
    %v815 = vld [vmem:[#allocation2 + $0x2d0] sm:$0xf]
    %v816 = vld [vmem:[#allocation2 + $0x2d4] sm:$0xf]
    %v817 = vld [vmem:[#allocation2 + $0x2d8] sm:$0xf]
    %v818 = vld [vmem:[#allocation2 + $0x2dc] sm:$0xf]
    %v819 = vld [vmem:[#allocation2 + $0x2e0] sm:$0xf]
    %v820 = vld [vmem:[#allocation2 + $0x2e4] sm:$0xf]
    %v821 = vld [vmem:[#allocation2 + $0x2e8] sm:$0xf]
    %v822 = vld [vmem:[#allocation2 + $0x2ec] sm:$0xf]
    %v823 = vld [vmem:[#allocation2 + $0x2f0] sm:$0xf]
    %v824 = vld [vmem:[#allocation2 + $0x2f4] sm:$0xf]
    %v825 = vld [vmem:[#allocation2 + $0x2f8] sm:$0xf]
    %v826 = vld [vmem:[#allocation2 + $0x2fc] sm:$0xf]
    %v827 = vld [vmem:[#allocation2 + $0x300] sm:$0xf]
    %v828 = vld [vmem:[#allocation2 + $0x304] sm:$0xf]
    %v829 = vld [vmem:[#allocation2 + $0x308] sm:$0xf]
    %v830 = vld [vmem:[#allocation2 + $0x30c] sm:$0xf]
    %v831 = vld [vmem:[#allocation2 + $0x310] sm:$0xf]
    %v832 = vld [vmem:[#allocation2 + $0x314] sm:$0xf]
    %v833 = vld [vmem:[#allocation2 + $0x318] sm:$0xf]
    %v834 = vld [vmem:[#allocation2 + $0x31c] sm:$0xf]
    %v835 = vld [vmem:[#allocation2 + $0x320] sm:$0xf]
    %v836 = vld [vmem:[#allocation2 + $0x324] sm:$0xf]
    %v837 = vld [vmem:[#allocation2 + $0x328] sm:$0xf]
    %v838 = vld [vmem:[#allocation2 + $0x32c] sm:$0xf]
    %v839 = vld [vmem:[#allocation2 + $0x330] sm:$0xf]
    %v840 = vld [vmem:[#allocation2 + $0x334] sm:$0xf]
    %v841 = vld [vmem:[#allocation2 + $0x338] sm:$0xf]
    %v842 = vld [vmem:[#allocation2 + $0x33c] sm:$0xf]
    %v843 = vld [vmem:[#allocation2 + $0x340] sm:$0xf]
    %v844 = vld [vmem:[#allocation2 + $0x344] sm:$0xf]
    %v845 = vld [vmem:[#allocation2 + $0x348] sm:$0xf]
    %v846 = vld [vmem:[#allocation2 + $0x34c] sm:$0xf]
    %v847 = vld [vmem:[#allocation2 + $0x350] sm:$0xf]
    %v848 = vld [vmem:[#allocation2 + $0x354] sm:$0xf]
    %v849 = vld [vmem:[#allocation2 + $0x358] sm:$0xf]
    %v850 = vld [vmem:[#allocation2 + $0x35c] sm:$0xf]
    %v851 = vld [vmem:[#allocation2 + $0x360] sm:$0xf]
    %v852 = vld [vmem:[#allocation2 + $0x364] sm:$0xf]
    %v853 = vld [vmem:[#allocation2 + $0x368] sm:$0xf]
    %v854 = vld [vmem:[#allocation2 + $0x36c] sm:$0xf]
    %v855 = vld [vmem:[#allocation2 + $0x370] sm:$0xf]
    %v856 = vld [vmem:[#allocation2 + $0x374] sm:$0xf]
    %v857 = vld [vmem:[#allocation2 + $0x378] sm:$0xf]
    %v858 = vld [vmem:[#allocation2 + $0x37c] sm:$0xf]
    %v859 = vld [vmem:[#allocation2 + $0x380] sm:$0xf]
    %v860 = vld [vmem:[#allocation2 + $0x384] sm:$0xf]
    %v861 = vld [vmem:[#allocation2 + $0x388] sm:$0xf]
    %v862 = vld [vmem:[#allocation2 + $0x38c] sm:$0xf]
    %v863 = vld [vmem:[#allocation2 + $0x390] sm:$0xf]
    %v864 = vld [vmem:[#allocation2 + $0x394] sm:$0xf]
    %v865 = vld [vmem:[#allocation2 + $0x398] sm:$0xf]
    %v866 = vld [vmem:[#allocation2 + $0x39c] sm:$0xf]
    %v867 = vld [vmem:[#allocation2 + $0x3a0] sm:$0xf]
    %v868 = vld [vmem:[#allocation2 + $0x3a4] sm:$0xf]
    %v869 = vld [vmem:[#allocation2 + $0x3a8] sm:$0xf]
    %v870 = vld [vmem:[#allocation2 + $0x3ac] sm:$0xf]
    %v871 = vld [vmem:[#allocation2 + $0x3b0] sm:$0xf]
    %v872 = vld [vmem:[#allocation2 + $0x3b4] sm:$0xf]
    %v873 = vld [vmem:[#allocation2 + $0x3b8] sm:$0xf]
    %v874 = vld [vmem:[#allocation2 + $0x3bc] sm:$0xf]
    %v875 = vld [vmem:[#allocation2 + $0x3c0] sm:$0xf]
    %v876 = vld [vmem:[#allocation2 + $0x3c4] sm:$0xf]
    %v877 = vld [vmem:[#allocation2 + $0x3c8] sm:$0xf]
    %v878 = vld [vmem:[#allocation2 + $0x3cc] sm:$0xf]
    %v879 = vld [vmem:[#allocation2 + $0x3d0] sm:$0xf]
    %v880 = vld [vmem:[#allocation2 + $0x3d4] sm:$0xf]
    %v881 = vld [vmem:[#allocation2 + $0x3d8] sm:$0xf]
    %v882 = vld [vmem:[#allocation2 + $0x3dc] sm:$0xf]
    %v883 = vld [vmem:[#allocation2 + $0x3e0] sm:$0xf]
    %v884 = vld [vmem:[#allocation2 + $0x3e4] sm:$0xf]
    %v885 = vld [vmem:[#allocation2 + $0x3e8] sm:$0xf]
    %v886 = vld [vmem:[#allocation2 + $0x3ec] sm:$0xf]
    %v887 = vld [vmem:[#allocation2 + $0x3f0] sm:$0xf]
    %v888 = vld [vmem:[#allocation2 + $0x3f4] sm:$0xf]
    %v889 = vld [vmem:[#allocation2 + $0x3f8] sm:$0xf]
    %v890 = vld [vmem:[#allocation2 + $0x3fc] sm:$0xf]
    %v891 = vld [vmem:[#allocation2 + $0x400] sm:$0xf]
    %v892 = vld [vmem:[#allocation2 + $0x404] sm:$0xf]
    %v893 = vld [vmem:[#allocation2 + $0x408] sm:$0xf]
    %v894 = vld [vmem:[#allocation2 + $0x40c] sm:$0xf]
    %v895 = vld [vmem:[#allocation2 + $0x410] sm:$0xf]
    %v896 = vld [vmem:[#allocation2 + $0x414] sm:$0xf]
    %v897 = vld [vmem:[#allocation2 + $0x418] sm:$0xf]
    %v898 = vld [vmem:[#allocation2 + $0x41c] sm:$0xf]
    %v899 = vld [vmem:[#allocation2 + $0x420] sm:$0xf]
    %v900 = vld [vmem:[#allocation2 + $0x424] sm:$0xf]
    %v901 = vld [vmem:[#allocation2 + $0x428] sm:$0xf]
    %v902 = vld [vmem:[#allocation2 + $0x42c] sm:$0xf]
    %v903 = vld [vmem:[#allocation2 + $0x430] sm:$0xf]
    %v904 = vld [vmem:[#allocation2 + $0x434] sm:$0xf]
    %v905 = vld [vmem:[#allocation2 + $0x438] sm:$0xf]
    %v906 = vld [vmem:[#allocation2 + $0x43c] sm:$0xf]
    %v907 = vld [vmem:[#allocation2 + $0x440] sm:$0xf]
    %v908 = vld [vmem:[#allocation2 + $0x444] sm:$0xf]
    %v909 = vld [vmem:[#allocation2 + $0x448] sm:$0xf]
    %v910 = vld [vmem:[#allocation2 + $0x44c] sm:$0xf]
    %v911 = vld [vmem:[#allocation2 + $0x450] sm:$0xf]
    %v912 = vld [vmem:[#allocation2 + $0x454] sm:$0xf]
    %v913 = vld [vmem:[#allocation2 + $0x458] sm:$0xf]
    %v914 = vld [vmem:[#allocation2 + $0x45c] sm:$0xf]
    %v915 = vld [vmem:[#allocation2 + $0x460] sm:$0xf]
    %v916 = vld [vmem:[#allocation2 + $0x464] sm:$0xf]
    %v917 = vld [vmem:[#allocation2 + $0x468] sm:$0xf]
    %v918 = vld [vmem:[#allocation2 + $0x46c] sm:$0xf]
    %v919 = vld [vmem:[#allocation2 + $0x470] sm:$0xf]
    %v920 = vld [vmem:[#allocation2 + $0x474] sm:$0xf]
    %v921 = vld [vmem:[#allocation2 + $0x478] sm:$0xf]
    %v922 = vld [vmem:[#allocation2 + $0x47c] sm:$0xf]
    %v923 = vld [vmem:[#allocation2 + $0x480] sm:$0xf]
    %v924 = vld [vmem:[#allocation2 + $0x484] sm:$0xf]
    %v925 = vld [vmem:[#allocation2 + $0x488] sm:$0xf]
    %v926 = vld [vmem:[#allocation2 + $0x48c] sm:$0xf]
    %v927 = vld [vmem:[#allocation2 + $0x490] sm:$0xf]
    %v928 = vld [vmem:[#allocation2 + $0x494] sm:$0xf]
    %v929 = vld [vmem:[#allocation2 + $0x498] sm:$0xf]
    %v930 = vld [vmem:[#allocation2 + $0x49c] sm:$0xf]
    %v931 = vld [vmem:[#allocation2 + $0x4a0] sm:$0xf]
    %v932 = vld [vmem:[#allocation2 + $0x4a4] sm:$0xf]
    %v933 = vld [vmem:[#allocation2 + $0x4a8] sm:$0xf]
    %v934 = vld [vmem:[#allocation2 + $0x4ac] sm:$0xf]
    %v935 = vld [vmem:[#allocation2 + $0x4b0] sm:$0xf]
    %v936 = vld [vmem:[#allocation2 + $0x4b4] sm:$0xf]
    %v937 = vld [vmem:[#allocation2 + $0x4b8] sm:$0xf]
    %v938 = vld [vmem:[#allocation2 + $0x4bc] sm:$0xf]
    %v939 = vld [vmem:[#allocation2 + $0x4c0] sm:$0xf]
    %v940 = vld [vmem:[#allocation2 + $0x4c4] sm:$0xf]
    %v941 = vld [vmem:[#allocation2 + $0x4c8] sm:$0xf]
    %v942 = vld [vmem:[#allocation2 + $0x4cc] sm:$0xf]
    %v943 = vld [vmem:[#allocation2 + $0x4d0] sm:$0xf]
    %v944 = vld [vmem:[#allocation2 + $0x4d4] sm:$0xf]
    %v945 = vld [vmem:[#allocation2 + $0x4d8] sm:$0xf]
    %v946 = vld [vmem:[#allocation2 + $0x4dc] sm:$0xf]
    %v947 = vld [vmem:[#allocation2 + $0x4e0] sm:$0xf]
    %v948 = vld [vmem:[#allocation2 + $0x4e4] sm:$0xf]
    %v949 = vld [vmem:[#allocation2 + $0x4e8] sm:$0xf]
    %v950 = vld [vmem:[#allocation2 + $0x4ec] sm:$0xf]
    %v951 = vld [vmem:[#allocation2 + $0x4f0] sm:$0xf]
    %v952 = vld [vmem:[#allocation2 + $0x4f4] sm:$0xf]
    %v953 = vld [vmem:[#allocation2 + $0x4f8] sm:$0xf]
    %v954 = vld [vmem:[#allocation2 + $0x4fc] sm:$0xf]
    %v955 = vld [vmem:[#allocation2 + $0x500] sm:$0xf]
    %v956 = vld [vmem:[#allocation2 + $0x504] sm:$0xf]
    %v957 = vld [vmem:[#allocation2 + $0x508] sm:$0xf]
    %v958 = vld [vmem:[#allocation2 + $0x50c] sm:$0xf]
    %v959 = vld [vmem:[#allocation2 + $0x510] sm:$0xf]
    %v960 = vld [vmem:[#allocation2 + $0x514] sm:$0xf]
    %v961 = vld [vmem:[#allocation2 + $0x518] sm:$0xf]
    %v962 = vld [vmem:[#allocation2 + $0x51c] sm:$0xf]
    %v963 = vld [vmem:[#allocation2 + $0x520] sm:$0xf]
    %v964 = vld [vmem:[#allocation2 + $0x524] sm:$0xf]
    %v965 = vld [vmem:[#allocation2 + $0x528] sm:$0xf]
    %v966 = vld [vmem:[#allocation2 + $0x52c] sm:$0xf]
    %v967 = vld [vmem:[#allocation2 + $0x530] sm:$0xf]
    %v968 = vld [vmem:[#allocation2 + $0x534] sm:$0xf]
    %v969 = vld [vmem:[#allocation2 + $0x538] sm:$0xf]
    %v970 = vld [vmem:[#allocation2 + $0x53c] sm:$0xf]
    %v971 = vld [vmem:[#allocation2 + $0x540] sm:$0xf]
    %v972 = vld [vmem:[#allocation2 + $0x544] sm:$0xf]
    %v973 = vld [vmem:[#allocation2 + $0x548] sm:$0xf]
    %v974 = vld [vmem:[#allocation2 + $0x54c] sm:$0xf]
    %v975 = vld [vmem:[#allocation2 + $0x550] sm:$0xf]
    %v976 = vld [vmem:[#allocation2 + $0x554] sm:$0xf]
    %v977 = vld [vmem:[#allocation2 + $0x558] sm:$0xf]
    %v978 = vld [vmem:[#allocation2 + $0x55c] sm:$0xf]
    %v979 = vld [vmem:[#allocation2 + $0x560] sm:$0xf]
    %v980 = vld [vmem:[#allocation2 + $0x564] sm:$0xf]
    %v981 = vld [vmem:[#allocation2 + $0x568] sm:$0xf]
    %v982 = vld [vmem:[#allocation2 + $0x56c] sm:$0xf]
    %v983 = vld [vmem:[#allocation2 + $0x570] sm:$0xf]
    %v984 = vld [vmem:[#allocation2 + $0x574] sm:$0xf]
    %v985 = vld [vmem:[#allocation2 + $0x578] sm:$0xf]
    %v986 = vld [vmem:[#allocation2 + $0x57c] sm:$0xf]
    %v987 = vld [vmem:[#allocation2 + $0x580] sm:$0xf]
    %v988 = vld [vmem:[#allocation2 + $0x584] sm:$0xf]
    %v989 = vld [vmem:[#allocation2 + $0x588] sm:$0xf]
    %v990 = vld [vmem:[#allocation2 + $0x58c] sm:$0xf]
    %v991 = vld [vmem:[#allocation2 + $0x590] sm:$0xf]
    %v992 = vld [vmem:[#allocation2 + $0x594] sm:$0xf]
    %v993 = vld [vmem:[#allocation2 + $0x598] sm:$0xf]
    %v994 = vld [vmem:[#allocation2 + $0x59c] sm:$0xf]
    %v995 = vld [vmem:[#allocation2 + $0x5a0] sm:$0xf]
    %v996 = vld [vmem:[#allocation2 + $0x5a4] sm:$0xf]
    %v997 = vld [vmem:[#allocation2 + $0x5a8] sm:$0xf]
    %v998 = vld [vmem:[#allocation2 + $0x5ac] sm:$0xf]
    %v999 = vld [vmem:[#allocation2 + $0x5b0] sm:$0xf]
    %v1000 = vld [vmem:[#allocation2 + $0x5b4] sm:$0xf]
    %v1001 = vld [vmem:[#allocation2 + $0x5b8] sm:$0xf]
    %v1002 = vld [vmem:[#allocation2 + $0x5bc] sm:$0xf]
    %v1003 = vld [vmem:[#allocation2 + $0x5c0] sm:$0xf]
    %v1004 = vld [vmem:[#allocation2 + $0x5c4] sm:$0xf]
    %v1005 = vld [vmem:[#allocation2 + $0x5c8] sm:$0xf]
    %v1006 = vld [vmem:[#allocation2 + $0x5cc] sm:$0xf]
    %v1007 = vld [vmem:[#allocation2 + $0x5d0] sm:$0xf]
    %v1008 = vld [vmem:[#allocation2 + $0x5d4] sm:$0xf]
    %v1009 = vld [vmem:[#allocation2 + $0x5d8] sm:$0xf]
    %v1010 = vld [vmem:[#allocation2 + $0x5dc] sm:$0xf]
    %v1011 = vld [vmem:[#allocation2 + $0x5e0] sm:$0xf]
    %v1012 = vld [vmem:[#allocation2 + $0x5e4] sm:$0xf]
    %v1013 = vld [vmem:[#allocation2 + $0x5e8] sm:$0xf]
    %v1014 = vld [vmem:[#allocation2 + $0x5ec] sm:$0xf]
    %v1015 = vld [vmem:[#allocation2 + $0x5f0] sm:$0xf]
    %v1016 = vld [vmem:[#allocation2 + $0x5f4] sm:$0xf]
    %v1017 = vld [vmem:[#allocation2 + $0x5f8] sm:$0xf]
    %v1018 = vld [vmem:[#allocation2 + $0x5fc] sm:$0xf]
    %v1019 = vld [vmem:[%s2] sm:$0x1]
    %v1021 = vlaneseq
    %v1022 = vshrl.u32 %v1021, 7
    %v1023 = vsub.s32 0, %v1022
    %v1024 = vrot.slane %v1019, %v1023
    %v1410 = vunpack.c.l.b16 %v635
    %v1411 = vunpack.c.l.b16 %v636
    %v1412 = vunpack.c.l.b16 %v637
    %v1413 = vunpack.c.l.b16 %v638
    %v1414 = vunpack.c.l.b16 %v639
    %v1415 = vunpack.c.l.b16 %v640
    %v1416 = vunpack.c.l.b16 %v641
    %v1417 = vunpack.c.l.b16 %v642
    %v1418 = vunpack.c.l.b16 %v643
    %v1419 = vunpack.c.l.b16 %v644
    %v1420 = vunpack.c.l.b16 %v645
    %v1421 = vunpack.c.l.b16 %v646
    %v1422 = vunpack.c.l.b16 %v647
    %v1423 = vunpack.c.l.b16 %v648
    %v1424 = vunpack.c.l.b16 %v649
    %v1425 = vunpack.c.l.b16 %v650
    %v1426 = vunpack.c.l.b16 %v651
    %v1427 = vunpack.c.l.b16 %v652
    %v1428 = vunpack.c.l.b16 %v653
    %v1429 = vunpack.c.l.b16 %v654
    %v1430 = vunpack.c.l.b16 %v655
    %v1431 = vunpack.c.l.b16 %v656
    %v1432 = vunpack.c.l.b16 %v657
    %v1433 = vunpack.c.l.b16 %v658
    %v1434 = vunpack.c.l.b16 %v659
    %v1435 = vunpack.c.l.b16 %v660
    %v1436 = vunpack.c.l.b16 %v661
    %v1437 = vunpack.c.l.b16 %v662
    %v1438 = vunpack.c.l.b16 %v663
    %v1439 = vunpack.c.l.b16 %v664
    %v1440 = vunpack.c.l.b16 %v665
    %v1441 = vunpack.c.l.b16 %v666
    %v1442 = vunpack.c.l.b16 %v667
    %v1443 = vunpack.c.l.b16 %v668
    %v1444 = vunpack.c.l.b16 %v669
    %v1445 = vunpack.c.l.b16 %v670
    %v1446 = vunpack.c.l.b16 %v671
    %v1447 = vunpack.c.l.b16 %v672
    %v1448 = vunpack.c.l.b16 %v673
    %v1449 = vunpack.c.l.b16 %v674
    %v1450 = vunpack.c.l.b16 %v675
    %v1451 = vunpack.c.l.b16 %v676
    %v1452 = vunpack.c.l.b16 %v677
    %v1453 = vunpack.c.l.b16 %v678
    %v1454 = vunpack.c.l.b16 %v679
    %v1455 = vunpack.c.l.b16 %v680
    %v1456 = vunpack.c.l.b16 %v681
    %v1457 = vunpack.c.l.b16 %v682
    %v1458 = vunpack.c.l.b16 %v683
    %v1459 = vunpack.c.l.b16 %v684
    %v1460 = vunpack.c.l.b16 %v685
    %v1461 = vunpack.c.l.b16 %v686
    %v1462 = vunpack.c.l.b16 %v687
    %v1463 = vunpack.c.l.b16 %v688
    %v1464 = vunpack.c.l.b16 %v689
    %v1465 = vunpack.c.l.b16 %v690
    %v1466 = vunpack.c.l.b16 %v691
    %v1467 = vunpack.c.l.b16 %v692
    %v1468 = vunpack.c.l.b16 %v693
    %v1469 = vunpack.c.l.b16 %v694
    %v1470 = vunpack.c.l.b16 %v695
    %v1471 = vunpack.c.l.b16 %v696
    %v1472 = vunpack.c.l.b16 %v697
    %v1473 = vunpack.c.l.b16 %v698
    %v1474 = vunpack.c.l.b16 %v699
    %v1475 = vunpack.c.l.b16 %v700
    %v1476 = vunpack.c.l.b16 %v701
    %v1477 = vunpack.c.l.b16 %v702
    %v1478 = vunpack.c.l.b16 %v703
    %v1479 = vunpack.c.l.b16 %v704
    %v1480 = vunpack.c.l.b16 %v705
    %v1481 = vunpack.c.l.b16 %v706
    %v1482 = vunpack.c.l.b16 %v707
    %v1483 = vunpack.c.l.b16 %v708
    %v1484 = vunpack.c.l.b16 %v709
    %v1485 = vunpack.c.l.b16 %v710
    %v1486 = vunpack.c.l.b16 %v711
    %v1487 = vunpack.c.l.b16 %v712
    %v1488 = vunpack.c.l.b16 %v713
    %v1489 = vunpack.c.l.b16 %v714
    %v1490 = vunpack.c.l.b16 %v715
    %v1491 = vunpack.c.l.b16 %v716
    %v1492 = vunpack.c.l.b16 %v717
    %v1493 = vunpack.c.l.b16 %v718
    %v1494 = vunpack.c.l.b16 %v719
    %v1495 = vunpack.c.l.b16 %v720
    %v1496 = vunpack.c.l.b16 %v721
    %v1497 = vunpack.c.l.b16 %v722
    %v1498 = vunpack.c.l.b16 %v723
    %v1499 = vunpack.c.l.b16 %v724
    %v1500 = vunpack.c.l.b16 %v725
    %v1501 = vunpack.c.l.b16 %v726
    %v1502 = vunpack.c.l.b16 %v727
    %v1503 = vunpack.c.l.b16 %v728
    %v1504 = vunpack.c.l.b16 %v729
    %v1505 = vunpack.c.l.b16 %v730
    %v1506 = vunpack.c.l.b16 %v731
    %v1507 = vunpack.c.l.b16 %v732
    %v1508 = vunpack.c.l.b16 %v733
    %v1509 = vunpack.c.l.b16 %v734
    %v1510 = vunpack.c.l.b16 %v735
    %v1511 = vunpack.c.l.b16 %v736
    %v1512 = vunpack.c.l.b16 %v737
    %v1513 = vunpack.c.l.b16 %v738
    %v1514 = vunpack.c.l.b16 %v739
    %v1515 = vunpack.c.l.b16 %v740
    %v1516 = vunpack.c.l.b16 %v741
    %v1517 = vunpack.c.l.b16 %v742
    %v1518 = vunpack.c.l.b16 %v743
    %v1519 = vunpack.c.l.b16 %v744
    %v1520 = vunpack.c.l.b16 %v745
    %v1521 = vunpack.c.l.b16 %v746
    %v1522 = vunpack.c.l.b16 %v747
    %v1523 = vunpack.c.l.b16 %v748
    %v1524 = vunpack.c.l.b16 %v749
    %v1525 = vunpack.c.l.b16 %v750
    %v1526 = vunpack.c.l.b16 %v751
    %v1527 = vunpack.c.l.b16 %v752
    %v1528 = vunpack.c.l.b16 %v753
    %v1529 = vunpack.c.l.b16 %v754
    %v1530 = vunpack.c.l.b16 %v755
    %v1531 = vunpack.c.l.b16 %v756
    %v1532 = vunpack.c.l.b16 %v757
    %v1533 = vunpack.c.l.b16 %v758
    %v1534 = vunpack.c.l.b16 %v759
    %v1535 = vunpack.c.l.b16 %v760
    %v1536 = vunpack.c.l.b16 %v761
    %v1537 = vunpack.c.l.b16 %v762
    %v1538 = vunpack.c.l.b16 %v763
    %v1539 = vunpack.c.l.b16 %v764
    %v1540 = vunpack.c.l.b16 %v765
    %v1541 = vunpack.c.l.b16 %v766
    %v1542 = vunpack.c.l.b16 %v767
    %v1543 = vunpack.c.l.b16 %v768
    %v1544 = vunpack.c.l.b16 %v769
    %v1545 = vunpack.c.l.b16 %v770
    %v1546 = vunpack.c.l.b16 %v771
    %v1547 = vunpack.c.l.b16 %v772
    %v1548 = vunpack.c.l.b16 %v773
    %v1549 = vunpack.c.l.b16 %v774
    %v1550 = vunpack.c.l.b16 %v775
    %v1551 = vunpack.c.l.b16 %v776
    %v1552 = vunpack.c.l.b16 %v777
    %v1553 = vunpack.c.l.b16 %v778
    %v1554 = vunpack.c.l.b16 %v779
    %v1555 = vunpack.c.l.b16 %v780
    %v1556 = vunpack.c.l.b16 %v781
    %v1557 = vunpack.c.l.b16 %v782
    %v1558 = vunpack.c.l.b16 %v783
    %v1559 = vunpack.c.l.b16 %v784
    %v1560 = vunpack.c.l.b16 %v785
    %v1561 = vunpack.c.l.b16 %v786
    %v1562 = vunpack.c.l.b16 %v787
    %v1563 = vunpack.c.l.b16 %v788
    %v1564 = vunpack.c.l.b16 %v789
    %v1565 = vunpack.c.l.b16 %v790
    %v1566 = vunpack.c.l.b16 %v791
    %v1567 = vunpack.c.l.b16 %v792
    %v1568 = vunpack.c.l.b16 %v793
    %v1569 = vunpack.c.l.b16 %v794
    %v1570 = vunpack.c.l.b16 %v795
    %v1571 = vunpack.c.l.b16 %v796
    %v1572 = vunpack.c.l.b16 %v797
    %v1573 = vunpack.c.l.b16 %v798
    %v1574 = vunpack.c.l.b16 %v799
    %v1575 = vunpack.c.l.b16 %v800
    %v1576 = vunpack.c.l.b16 %v801
    %v1577 = vunpack.c.l.b16 %v802
    %v1578 = vunpack.c.l.b16 %v803
    %v1579 = vunpack.c.l.b16 %v804
    %v1580 = vunpack.c.l.b16 %v805
    %v1581 = vunpack.c.l.b16 %v806
    %v1582 = vunpack.c.l.b16 %v807
    %v1583 = vunpack.c.l.b16 %v808
    %v1584 = vunpack.c.l.b16 %v809
    %v1585 = vunpack.c.l.b16 %v810
    %v1586 = vunpack.c.l.b16 %v811
    %v1587 = vunpack.c.l.b16 %v812
    %v1588 = vunpack.c.l.b16 %v813
    %v1589 = vunpack.c.l.b16 %v814
    %v1590 = vunpack.c.l.b16 %v815
    %v1591 = vunpack.c.l.b16 %v816
    %v1592 = vunpack.c.l.b16 %v817
    %v1593 = vunpack.c.l.b16 %v818
    %v1594 = vunpack.c.l.b16 %v819
    %v1595 = vunpack.c.l.b16 %v820
    %v1596 = vunpack.c.l.b16 %v821
    %v1597 = vunpack.c.l.b16 %v822
    %v1598 = vunpack.c.l.b16 %v823
    %v1599 = vunpack.c.l.b16 %v824
    %v1600 = vunpack.c.l.b16 %v825
    %v1601 = vunpack.c.l.b16 %v826
    %v1602 = vunpack.c.l.b16 %v827
    %v1603 = vunpack.c.l.b16 %v828
    %v1604 = vunpack.c.l.b16 %v829
    %v1605 = vunpack.c.l.b16 %v830
    %v1606 = vunpack.c.l.b16 %v831
    %v1607 = vunpack.c.l.b16 %v832
    %v1608 = vunpack.c.l.b16 %v833
    %v1609 = vunpack.c.l.b16 %v834
    %v1610 = vunpack.c.l.b16 %v835
    %v1611 = vunpack.c.l.b16 %v836
    %v1612 = vunpack.c.l.b16 %v837
    %v1613 = vunpack.c.l.b16 %v838
    %v1614 = vunpack.c.l.b16 %v839
    %v1615 = vunpack.c.l.b16 %v840
    %v1616 = vunpack.c.l.b16 %v841
    %v1617 = vunpack.c.l.b16 %v842
    %v1618 = vunpack.c.l.b16 %v843
    %v1619 = vunpack.c.l.b16 %v844
    %v1620 = vunpack.c.l.b16 %v845
    %v1621 = vunpack.c.l.b16 %v846
    %v1622 = vunpack.c.l.b16 %v847
    %v1623 = vunpack.c.l.b16 %v848
    %v1624 = vunpack.c.l.b16 %v849
    %v1625 = vunpack.c.l.b16 %v850
    %v1626 = vunpack.c.l.b16 %v851
    %v1627 = vunpack.c.l.b16 %v852
    %v1628 = vunpack.c.l.b16 %v853
    %v1629 = vunpack.c.l.b16 %v854
    %v1630 = vunpack.c.l.b16 %v855
    %v1631 = vunpack.c.l.b16 %v856
    %v1632 = vunpack.c.l.b16 %v857
    %v1633 = vunpack.c.l.b16 %v858
    %v1634 = vunpack.c.l.b16 %v859
    %v1635 = vunpack.c.l.b16 %v860
    %v1636 = vunpack.c.l.b16 %v861
    %v1637 = vunpack.c.l.b16 %v862
    %v1638 = vunpack.c.l.b16 %v863
    %v1639 = vunpack.c.l.b16 %v864
    %v1640 = vunpack.c.l.b16 %v865
    %v1641 = vunpack.c.l.b16 %v866
    %v1642 = vunpack.c.l.b16 %v867
    %v1643 = vunpack.c.l.b16 %v868
    %v1644 = vunpack.c.l.b16 %v869
    %v1645 = vunpack.c.l.b16 %v870
    %v1646 = vunpack.c.l.b16 %v871
    %v1647 = vunpack.c.l.b16 %v872
    %v1648 = vunpack.c.l.b16 %v873
    %v1649 = vunpack.c.l.b16 %v874
    %v1650 = vunpack.c.l.b16 %v875
    %v1651 = vunpack.c.l.b16 %v876
    %v1652 = vunpack.c.l.b16 %v877
    %v1653 = vunpack.c.l.b16 %v878
    %v1654 = vunpack.c.l.b16 %v879
    %v1655 = vunpack.c.l.b16 %v880
    %v1656 = vunpack.c.l.b16 %v881
    %v1657 = vunpack.c.l.b16 %v882
    %v1658 = vunpack.c.l.b16 %v883
    %v1659 = vunpack.c.l.b16 %v884
    %v1660 = vunpack.c.l.b16 %v885
    %v1661 = vunpack.c.l.b16 %v886
    %v1662 = vunpack.c.l.b16 %v887
    %v1663 = vunpack.c.l.b16 %v888
    %v1664 = vunpack.c.l.b16 %v889
    %v1665 = vunpack.c.l.b16 %v890
    %v1666 = vunpack.c.l.b16 %v891
    %v1667 = vunpack.c.l.b16 %v892
    %v1668 = vunpack.c.l.b16 %v893
    %v1669 = vunpack.c.l.b16 %v894
    %v1670 = vunpack.c.l.b16 %v895
    %v1671 = vunpack.c.l.b16 %v896
    %v1672 = vunpack.c.l.b16 %v897
    %v1673 = vunpack.c.l.b16 %v898
    %v1674 = vunpack.c.l.b16 %v899
    %v1675 = vunpack.c.l.b16 %v900
    %v1676 = vunpack.c.l.b16 %v901
    %v1677 = vunpack.c.l.b16 %v902
    %v1678 = vunpack.c.l.b16 %v903
    %v1679 = vunpack.c.l.b16 %v904
    %v1680 = vunpack.c.l.b16 %v905
    %v1681 = vunpack.c.l.b16 %v906
    %v1682 = vunpack.c.l.b16 %v907
    %v1683 = vunpack.c.l.b16 %v908
    %v1684 = vunpack.c.l.b16 %v909
    %v1685 = vunpack.c.l.b16 %v910
    %v1686 = vunpack.c.l.b16 %v911
    %v1687 = vunpack.c.l.b16 %v912
    %v1688 = vunpack.c.l.b16 %v913
    %v1689 = vunpack.c.l.b16 %v914
    %v1690 = vunpack.c.l.b16 %v915
    %v1691 = vunpack.c.l.b16 %v916
    %v1692 = vunpack.c.l.b16 %v917
    %v1693 = vunpack.c.l.b16 %v918
    %v1694 = vunpack.c.l.b16 %v919
    %v1695 = vunpack.c.l.b16 %v920
    %v1696 = vunpack.c.l.b16 %v921
    %v1697 = vunpack.c.l.b16 %v922
    %v1698 = vunpack.c.l.b16 %v923
    %v1699 = vunpack.c.l.b16 %v924
    %v1700 = vunpack.c.l.b16 %v925
    %v1701 = vunpack.c.l.b16 %v926
    %v1702 = vunpack.c.l.b16 %v927
    %v1703 = vunpack.c.l.b16 %v928
    %v1704 = vunpack.c.l.b16 %v929
    %v1705 = vunpack.c.l.b16 %v930
    %v1706 = vunpack.c.l.b16 %v931
    %v1707 = vunpack.c.l.b16 %v932
    %v1708 = vunpack.c.l.b16 %v933
    %v1709 = vunpack.c.l.b16 %v934
    %v1710 = vunpack.c.l.b16 %v935
    %v1711 = vunpack.c.l.b16 %v936
    %v1712 = vunpack.c.l.b16 %v937
    %v1713 = vunpack.c.l.b16 %v938
    %v1714 = vunpack.c.l.b16 %v939
    %v1715 = vunpack.c.l.b16 %v940
    %v1716 = vunpack.c.l.b16 %v941
    %v1717 = vunpack.c.l.b16 %v942
    %v1718 = vunpack.c.l.b16 %v943
    %v1719 = vunpack.c.l.b16 %v944
    %v1720 = vunpack.c.l.b16 %v945
    %v1721 = vunpack.c.l.b16 %v946
    %v1722 = vunpack.c.l.b16 %v947
    %v1723 = vunpack.c.l.b16 %v948
    %v1724 = vunpack.c.l.b16 %v949
    %v1725 = vunpack.c.l.b16 %v950
    %v1726 = vunpack.c.l.b16 %v951
    %v1727 = vunpack.c.l.b16 %v952
    %v1728 = vunpack.c.l.b16 %v953
    %v1729 = vunpack.c.l.b16 %v954
    %v1730 = vunpack.c.l.b16 %v955
    %v1731 = vunpack.c.l.b16 %v956
    %v1732 = vunpack.c.l.b16 %v957
    %v1733 = vunpack.c.l.b16 %v958
    %v1734 = vunpack.c.l.b16 %v959
    %v1735 = vunpack.c.l.b16 %v960
    %v1736 = vunpack.c.l.b16 %v961
    %v1737 = vunpack.c.l.b16 %v962
    %v1738 = vunpack.c.l.b16 %v963
    %v1739 = vunpack.c.l.b16 %v964
    %v1740 = vunpack.c.l.b16 %v965
    %v1741 = vunpack.c.l.b16 %v966
    %v1742 = vunpack.c.l.b16 %v967
    %v1743 = vunpack.c.l.b16 %v968
    %v1744 = vunpack.c.l.b16 %v969
    %v1745 = vunpack.c.l.b16 %v970
    %v1746 = vunpack.c.l.b16 %v971
    %v1747 = vunpack.c.l.b16 %v972
    %v1748 = vunpack.c.l.b16 %v973
    %v1749 = vunpack.c.l.b16 %v974
    %v1750 = vunpack.c.l.b16 %v975
    %v1751 = vunpack.c.l.b16 %v976
    %v1752 = vunpack.c.l.b16 %v977
    %v1753 = vunpack.c.l.b16 %v978
    %v1754 = vunpack.c.l.b16 %v979
    %v1755 = vunpack.c.l.b16 %v980
    %v1756 = vunpack.c.l.b16 %v981
    %v1757 = vunpack.c.l.b16 %v982
    %v1758 = vunpack.c.l.b16 %v983
    %v1759 = vunpack.c.l.b16 %v984
    %v1760 = vunpack.c.l.b16 %v985
    %v1761 = vunpack.c.l.b16 %v986
    %v1762 = vunpack.c.l.b16 %v987
    %v1763 = vunpack.c.l.b16 %v988
    %v1764 = vunpack.c.l.b16 %v989
    %v1765 = vunpack.c.l.b16 %v990
    %v1766 = vunpack.c.l.b16 %v991
    %v1767 = vunpack.c.l.b16 %v992
    %v1768 = vunpack.c.l.b16 %v993
    %v1769 = vunpack.c.l.b16 %v994
    %v1770 = vunpack.c.l.b16 %v995
    %v1771 = vunpack.c.l.b16 %v996
    %v1772 = vunpack.c.l.b16 %v997
    %v1773 = vunpack.c.l.b16 %v998
    %v1774 = vunpack.c.l.b16 %v999
    %v1775 = vunpack.c.l.b16 %v1000
    %v1776 = vunpack.c.l.b16 %v1001
    %v1777 = vunpack.c.l.b16 %v1002
    %v1778 = vunpack.c.l.b16 %v1003
    %v1779 = vunpack.c.l.b16 %v1004
    %v1780 = vunpack.c.l.b16 %v1005
    %v1781 = vunpack.c.l.b16 %v1006
    %v1782 = vunpack.c.l.b16 %v1007
    %v1783 = vunpack.c.l.b16 %v1008
    %v1784 = vunpack.c.l.b16 %v1009
    %v1785 = vunpack.c.l.b16 %v1010
    %v1786 = vunpack.c.l.b16 %v1011
    %v1787 = vunpack.c.l.b16 %v1012
    %v1788 = vunpack.c.l.b16 %v1013
    %v1789 = vunpack.c.l.b16 %v1014
    %v1790 = vunpack.c.l.b16 %v1015
    %v1791 = vunpack.c.l.b16 %v1016
    %v1792 = vunpack.c.l.b16 %v1017
    %v1793 = vunpack.c.l.b16 %v1018
    %v1794 = vpack.c.b16 %v1411, %v1410
    %v1795 = vpack.c.b16 %v1413, %v1412
    %v1796 = vpack.c.b16 %v1415, %v1414
    %v1797 = vpack.c.b16 %v1417, %v1416
    %v1798 = vpack.c.b16 %v1419, %v1418
    %v1799 = vpack.c.b16 %v1421, %v1420
    %v1800 = vpack.c.b16 %v1423, %v1422
    %v1801 = vpack.c.b16 %v1425, %v1424
    %v1802 = vpack.c.b16 %v1427, %v1426
    %v1803 = vpack.c.b16 %v1429, %v1428
    %v1804 = vpack.c.b16 %v1431, %v1430
    %v1805 = vpack.c.b16 %v1433, %v1432
    %v1806 = vpack.c.b16 %v1435, %v1434
    %v1807 = vpack.c.b16 %v1437, %v1436
    %v1808 = vpack.c.b16 %v1439, %v1438
    %v1809 = vpack.c.b16 %v1441, %v1440
    %v1810 = vpack.c.b16 %v1443, %v1442
    %v1811 = vpack.c.b16 %v1445, %v1444
    %v1812 = vpack.c.b16 %v1447, %v1446
    %v1813 = vpack.c.b16 %v1449, %v1448
    %v1814 = vpack.c.b16 %v1451, %v1450
    %v1815 = vpack.c.b16 %v1453, %v1452
    %v1816 = vpack.c.b16 %v1455, %v1454
    %v1817 = vpack.c.b16 %v1457, %v1456
    %v1818 = vpack.c.b16 %v1459, %v1458
    %v1819 = vpack.c.b16 %v1461, %v1460
    %v1820 = vpack.c.b16 %v1463, %v1462
    %v1821 = vpack.c.b16 %v1465, %v1464
    %v1822 = vpack.c.b16 %v1467, %v1466
    %v1823 = vpack.c.b16 %v1469, %v1468
    %v1824 = vpack.c.b16 %v1471, %v1470
    %v1825 = vpack.c.b16 %v1473, %v1472
    %v1826 = vpack.c.b16 %v1475, %v1474
    %v1827 = vpack.c.b16 %v1477, %v1476
    %v1828 = vpack.c.b16 %v1479, %v1478
    %v1829 = vpack.c.b16 %v1481, %v1480
    %v1830 = vpack.c.b16 %v1483, %v1482
    %v1831 = vpack.c.b16 %v1485, %v1484
    %v1832 = vpack.c.b16 %v1487, %v1486
    %v1833 = vpack.c.b16 %v1489, %v1488
    %v1834 = vpack.c.b16 %v1491, %v1490
    %v1835 = vpack.c.b16 %v1493, %v1492
    %v1836 = vpack.c.b16 %v1495, %v1494
    %v1837 = vpack.c.b16 %v1497, %v1496
    %v1838 = vpack.c.b16 %v1499, %v1498
    %v1839 = vpack.c.b16 %v1501, %v1500
    %v1840 = vpack.c.b16 %v1503, %v1502
    %v1841 = vpack.c.b16 %v1505, %v1504
    %v1842 = vpack.c.b16 %v1507, %v1506
    %v1843 = vpack.c.b16 %v1509, %v1508
    %v1844 = vpack.c.b16 %v1511, %v1510
    %v1845 = vpack.c.b16 %v1513, %v1512
    %v1846 = vpack.c.b16 %v1515, %v1514
    %v1847 = vpack.c.b16 %v1517, %v1516
    %v1848 = vpack.c.b16 %v1519, %v1518
    %v1849 = vpack.c.b16 %v1521, %v1520
    %v1850 = vpack.c.b16 %v1523, %v1522
    %v1851 = vpack.c.b16 %v1525, %v1524
    %v1852 = vpack.c.b16 %v1527, %v1526
    %v1853 = vpack.c.b16 %v1529, %v1528
    %v1854 = vpack.c.b16 %v1531, %v1530
    %v1855 = vpack.c.b16 %v1533, %v1532
    %v1856 = vpack.c.b16 %v1535, %v1534
    %v1857 = vpack.c.b16 %v1537, %v1536
    %v1858 = vpack.c.b16 %v1539, %v1538
    %v1859 = vpack.c.b16 %v1541, %v1540
    %v1860 = vpack.c.b16 %v1543, %v1542
    %v1861 = vpack.c.b16 %v1545, %v1544
    %v1862 = vpack.c.b16 %v1547, %v1546
    %v1863 = vpack.c.b16 %v1549, %v1548
    %v1864 = vpack.c.b16 %v1551, %v1550
    %v1865 = vpack.c.b16 %v1553, %v1552
    %v1866 = vpack.c.b16 %v1555, %v1554
    %v1867 = vpack.c.b16 %v1557, %v1556
    %v1868 = vpack.c.b16 %v1559, %v1558
    %v1869 = vpack.c.b16 %v1561, %v1560
    %v1870 = vpack.c.b16 %v1563, %v1562
    %v1871 = vpack.c.b16 %v1565, %v1564
    %v1872 = vpack.c.b16 %v1567, %v1566
    %v1873 = vpack.c.b16 %v1569, %v1568
    %v1874 = vpack.c.b16 %v1571, %v1570
    %v1875 = vpack.c.b16 %v1573, %v1572
    %v1876 = vpack.c.b16 %v1575, %v1574
    %v1877 = vpack.c.b16 %v1577, %v1576
    %v1878 = vpack.c.b16 %v1579, %v1578
    %v1879 = vpack.c.b16 %v1581, %v1580
    %v1880 = vpack.c.b16 %v1583, %v1582
    %v1881 = vpack.c.b16 %v1585, %v1584
    %v1882 = vpack.c.b16 %v1587, %v1586
    %v1883 = vpack.c.b16 %v1589, %v1588
    %v1884 = vpack.c.b16 %v1591, %v1590
    %v1885 = vpack.c.b16 %v1593, %v1592
    %v1886 = vpack.c.b16 %v1595, %v1594
    %v1887 = vpack.c.b16 %v1597, %v1596
    %v1888 = vpack.c.b16 %v1599, %v1598
    %v1889 = vpack.c.b16 %v1601, %v1600
    %v1890 = vpack.c.b16 %v1603, %v1602
    %v1891 = vpack.c.b16 %v1605, %v1604
    %v1892 = vpack.c.b16 %v1607, %v1606
    %v1893 = vpack.c.b16 %v1609, %v1608
    %v1894 = vpack.c.b16 %v1611, %v1610
    %v1895 = vpack.c.b16 %v1613, %v1612
    %v1896 = vpack.c.b16 %v1615, %v1614
    %v1897 = vpack.c.b16 %v1617, %v1616
    %v1898 = vpack.c.b16 %v1619, %v1618
    %v1899 = vpack.c.b16 %v1621, %v1620
    %v1900 = vpack.c.b16 %v1623, %v1622
    %v1901 = vpack.c.b16 %v1625, %v1624
    %v1902 = vpack.c.b16 %v1627, %v1626
    %v1903 = vpack.c.b16 %v1629, %v1628
    %v1904 = vpack.c.b16 %v1631, %v1630
    %v1905 = vpack.c.b16 %v1633, %v1632
    %v1906 = vpack.c.b16 %v1635, %v1634
    %v1907 = vpack.c.b16 %v1637, %v1636
    %v1908 = vpack.c.b16 %v1639, %v1638
    %v1909 = vpack.c.b16 %v1641, %v1640
    %v1910 = vpack.c.b16 %v1643, %v1642
    %v1911 = vpack.c.b16 %v1645, %v1644
    %v1912 = vpack.c.b16 %v1647, %v1646
    %v1913 = vpack.c.b16 %v1649, %v1648
    %v1914 = vpack.c.b16 %v1651, %v1650
    %v1915 = vpack.c.b16 %v1653, %v1652
    %v1916 = vpack.c.b16 %v1655, %v1654
    %v1917 = vpack.c.b16 %v1657, %v1656
    %v1918 = vpack.c.b16 %v1659, %v1658
    %v1919 = vpack.c.b16 %v1661, %v1660
    %v1920 = vpack.c.b16 %v1663, %v1662
    %v1921 = vpack.c.b16 %v1665, %v1664
    %v1922 = vpack.c.b16 %v1667, %v1666
    %v1923 = vpack.c.b16 %v1669, %v1668
    %v1924 = vpack.c.b16 %v1671, %v1670
    %v1925 = vpack.c.b16 %v1673, %v1672
    %v1926 = vpack.c.b16 %v1675, %v1674
    %v1927 = vpack.c.b16 %v1677, %v1676
    %v1928 = vpack.c.b16 %v1679, %v1678
    %v1929 = vpack.c.b16 %v1681, %v1680
    %v1930 = vpack.c.b16 %v1683, %v1682
    %v1931 = vpack.c.b16 %v1685, %v1684
    %v1932 = vpack.c.b16 %v1687, %v1686
    %v1933 = vpack.c.b16 %v1689, %v1688
    %v1934 = vpack.c.b16 %v1691, %v1690
    %v1935 = vpack.c.b16 %v1693, %v1692
    %v1936 = vpack.c.b16 %v1695, %v1694
    %v1937 = vpack.c.b16 %v1697, %v1696
    %v1938 = vpack.c.b16 %v1699, %v1698
    %v1939 = vpack.c.b16 %v1701, %v1700
    %v1940 = vpack.c.b16 %v1703, %v1702
    %v1941 = vpack.c.b16 %v1705, %v1704
    %v1942 = vpack.c.b16 %v1707, %v1706
    %v1943 = vpack.c.b16 %v1709, %v1708
    %v1944 = vpack.c.b16 %v1711, %v1710
    %v1945 = vpack.c.b16 %v1713, %v1712
    %v1946 = vpack.c.b16 %v1715, %v1714
    %v1947 = vpack.c.b16 %v1717, %v1716
    %v1948 = vpack.c.b16 %v1719, %v1718
    %v1949 = vpack.c.b16 %v1721, %v1720
    %v1950 = vpack.c.b16 %v1723, %v1722
    %v1951 = vpack.c.b16 %v1725, %v1724
    %v1952 = vpack.c.b16 %v1727, %v1726
    %v1953 = vpack.c.b16 %v1729, %v1728
    %v1954 = vpack.c.b16 %v1731, %v1730
    %v1955 = vpack.c.b16 %v1733, %v1732
    %v1956 = vpack.c.b16 %v1735, %v1734
    %v1957 = vpack.c.b16 %v1737, %v1736
    %v1958 = vpack.c.b16 %v1739, %v1738
    %v1959 = vpack.c.b16 %v1741, %v1740
    %v1960 = vpack.c.b16 %v1743, %v1742
    %v1961 = vpack.c.b16 %v1745, %v1744
    %v1962 = vpack.c.b16 %v1747, %v1746
    %v1963 = vpack.c.b16 %v1749, %v1748
    %v1964 = vpack.c.b16 %v1751, %v1750
    %v1965 = vpack.c.b16 %v1753, %v1752
    %v1966 = vpack.c.b16 %v1755, %v1754
    %v1967 = vpack.c.b16 %v1757, %v1756
    %v1968 = vpack.c.b16 %v1759, %v1758
    %v1969 = vpack.c.b16 %v1761, %v1760
    %v1970 = vpack.c.b16 %v1763, %v1762
    %v1971 = vpack.c.b16 %v1765, %v1764
    %v1972 = vpack.c.b16 %v1767, %v1766
    %v1973 = vpack.c.b16 %v1769, %v1768
    %v1974 = vpack.c.b16 %v1771, %v1770
    %v1975 = vpack.c.b16 %v1773, %v1772
    %v1976 = vpack.c.b16 %v1775, %v1774
    %v1977 = vpack.c.b16 %v1777, %v1776
    %v1978 = vpack.c.b16 %v1779, %v1778
    %v1979 = vpack.c.b16 %v1781, %v1780
    %v1980 = vpack.c.b16 %v1783, %v1782
    %v1981 = vpack.c.b16 %v1785, %v1784
    %v1982 = vpack.c.b16 %v1787, %v1786
    %v1983 = vpack.c.b16 %v1789, %v1788
    %v1984 = vpack.c.b16 %v1791, %v1790
    %v1985 = vpack.c.b16 %v1793, %v1792
    %2178 = vmatprep.subr.bf16.mxu0 0
    %2179 = vmatpush1.bf16.msra.mxu0 %v1801
    %2180 = vmatprep.subr.bf16.mxu0 0
    %2181 = vmatpush1.bf16.msra.mxu0 %v1800
    %2182 = vmatprep.subr.bf16.mxu0 0
    %2183 = vmatpush1.bf16.msra.mxu0 %v1799
    %2184 = vmatprep.subr.bf16.mxu0 0
    %2185 = vmatpush1.bf16.msra.mxu0 %v1798
    %2186 = vmatprep.subr.bf16.mxu0 0
    %2187 = vmatpush1.bf16.msra.mxu0 %v1797
    %2188 = vmatprep.subr.bf16.mxu0 0
    %2189 = vmatpush1.bf16.msra.mxu0 %v1796
    %2190 = vmatprep.subr.bf16.mxu0 0
    %2191 = vmatpush1.bf16.msra.mxu0 %v1795
    %2192 = vmatprep.subr.bf16.mxu0 0
    %2193 = vmatpush1.bf16.msra.mxu0 %v1794
    %2194 = vmatprep.subr.bf16.mxu0 0
    %2195 = vmatpush2.bf16.msra.mxu0 %v1809
    %2196 = vmatprep.subr.bf16.mxu0 0
    %2197 = vmatpush2.bf16.msra.mxu0 %v1808
    %2198 = vmatprep.subr.bf16.mxu0 0
    %2199 = vmatpush2.bf16.msra.mxu0 %v1807
    %2200 = vmatprep.subr.bf16.mxu0 0
    %2201 = vmatpush2.bf16.msra.mxu0 %v1806
    %2202 = vmatprep.subr.bf16.mxu0 0
    %2203 = vmatpush2.bf16.msra.mxu0 %v1805
    %2204 = vmatprep.subr.bf16.mxu0 0
    %2205 = vmatpush2.bf16.msra.mxu0 %v1804
    %2206 = vmatprep.subr.bf16.mxu0 0
    %2207 = vmatpush2.bf16.msra.mxu0 %v1803
    %2208 = vmatprep.subr.bf16.mxu0 0
    %2209 = vmatpush2.bf16.msra.mxu0 %v1802
    %2210 = vmatprep.mubr.bf16.mxu0 %v612
    %2211 = vmatmul.mubr.bf16.gmra.mxu0 %v611
    %v2212 = vpop.f32.mrf.mxu0
    %v2213 = vadd.f32 %v1024, %v2212
    %v2214 = vpop.f32.mrf.mxu0
    %v2215 = vpop.f32.mrf.mxu0
    %v2216 = vadd.f32 %v1024, %v2215
    %v2217 = vpop.f32.mrf.mxu0
    %2218 = vdwg.mxu0
    %2219 = vmatprep.subr.bf16.mxu0 0
    %2220 = vmatpush1.bf16.msra.mxu0 %v1817
    %2221 = vmatprep.subr.bf16.mxu0 0
    %2222 = vmatpush1.bf16.msra.mxu0 %v1816
    %2223 = vmatprep.subr.bf16.mxu0 0
    %2224 = vmatpush1.bf16.msra.mxu0 %v1815
    %2225 = vmatprep.subr.bf16.mxu0 0
    %2226 = vmatpush1.bf16.msra.mxu0 %v1814
    %2227 = vmatprep.subr.bf16.mxu0 0
    %2228 = vmatpush1.bf16.msra.mxu0 %v1813
    %2229 = vmatprep.subr.bf16.mxu0 0
    %2230 = vmatpush1.bf16.msra.mxu0 %v1812
    %2231 = vmatprep.subr.bf16.mxu0 0
    %2232 = vmatpush1.bf16.msra.mxu0 %v1811
    %2233 = vmatprep.subr.bf16.mxu0 0
    %2234 = vmatpush1.bf16.msra.mxu0 %v1810
    %2235 = vmatprep.subr.bf16.mxu0 0
    %2236 = vmatpush2.bf16.msra.mxu0 %v1825
    %2237 = vmatprep.subr.bf16.mxu0 0
    %2238 = vmatpush2.bf16.msra.mxu0 %v1824
    %2239 = vmatprep.subr.bf16.mxu0 0
    %2240 = vmatpush2.bf16.msra.mxu0 %v1823
    %2241 = vmatprep.subr.bf16.mxu0 0
    %2242 = vmatpush2.bf16.msra.mxu0 %v1822
    %2243 = vmatprep.subr.bf16.mxu0 0
    %2244 = vmatpush2.bf16.msra.mxu0 %v1821
    %2245 = vmatprep.subr.bf16.mxu0 0
    %2246 = vmatpush2.bf16.msra.mxu0 %v1820
    %2247 = vmatprep.subr.bf16.mxu0 0
    %2248 = vmatpush2.bf16.msra.mxu0 %v1819
    %2249 = vmatprep.subr.bf16.mxu0 0
    %2250 = vmatpush2.bf16.msra.mxu0 %v1818
    %2251 = vmatprep.mubr.bf16.mxu0 %v614
    %2252 = vmatmul.mubr.bf16.gmra.mxu0 %v613
    %v2253 = vpop.f32.mrf.mxu0
    %v2254 = vadd.f32 %v2213, %v2253
    %v2255 = vpop.f32.mrf.mxu0
    %v2256 = vpop.f32.mrf.mxu0
    %v2257 = vadd.f32 %v2216, %v2256
    %v2258 = vpop.f32.mrf.mxu0
    %2259 = vdwg.mxu0
    %2260 = vmatprep.subr.bf16.mxu0 0
    %2261 = vmatpush1.bf16.msra.mxu0 %v1833
    %2262 = vmatprep.subr.bf16.mxu0 0
    %2263 = vmatpush1.bf16.msra.mxu0 %v1832
    %2264 = vmatprep.subr.bf16.mxu0 0
    %2265 = vmatpush1.bf16.msra.mxu0 %v1831
    %2266 = vmatprep.subr.bf16.mxu0 0
    %2267 = vmatpush1.bf16.msra.mxu0 %v1830
    %2268 = vmatprep.subr.bf16.mxu0 0
    %2269 = vmatpush1.bf16.msra.mxu0 %v1829
    %2270 = vmatprep.subr.bf16.mxu0 0
    %2271 = vmatpush1.bf16.msra.mxu0 %v1828
    %2272 = vmatprep.subr.bf16.mxu0 0
    %2273 = vmatpush1.bf16.msra.mxu0 %v1827
    %2274 = vmatprep.subr.bf16.mxu0 0
    %2275 = vmatpush1.bf16.msra.mxu0 %v1826
    %2276 = vmatprep.subr.bf16.mxu0 0
    %2277 = vmatpush2.bf16.msra.mxu0 %v1841
    %2278 = vmatprep.subr.bf16.mxu0 0
    %2279 = vmatpush2.bf16.msra.mxu0 %v1840
    %2280 = vmatprep.subr.bf16.mxu0 0
    %2281 = vmatpush2.bf16.msra.mxu0 %v1839
    %2282 = vmatprep.subr.bf16.mxu0 0
    %2283 = vmatpush2.bf16.msra.mxu0 %v1838
    %2284 = vmatprep.subr.bf16.mxu0 0
    %2285 = vmatpush2.bf16.msra.mxu0 %v1837
    %2286 = vmatprep.subr.bf16.mxu0 0
    %2287 = vmatpush2.bf16.msra.mxu0 %v1836
    %2288 = vmatprep.subr.bf16.mxu0 0
    %2289 = vmatpush2.bf16.msra.mxu0 %v1835
    %2290 = vmatprep.subr.bf16.mxu0 0
    %2291 = vmatpush2.bf16.msra.mxu0 %v1834
    %2292 = vmatprep.mubr.bf16.mxu0 %v616
    %2293 = vmatmul.mubr.bf16.gmra.mxu0 %v615
    %v2294 = vpop.f32.mrf.mxu0
    %v2295 = vadd.f32 %v2254, %v2294
    %v2296 = vpop.f32.mrf.mxu0
    %v2297 = vpop.f32.mrf.mxu0
    %v2298 = vadd.f32 %v2257, %v2297
    %v2299 = vpop.f32.mrf.mxu0
    %2300 = vdwg.mxu0
    %2301 = vmatprep.subr.bf16.mxu0 0
    %2302 = vmatpush1.bf16.msra.mxu0 %v1849
    %2303 = vmatprep.subr.bf16.mxu0 0
    %2304 = vmatpush1.bf16.msra.mxu0 %v1848
    %2305 = vmatprep.subr.bf16.mxu0 0
    %2306 = vmatpush1.bf16.msra.mxu0 %v1847
    %2307 = vmatprep.subr.bf16.mxu0 0
    %2308 = vmatpush1.bf16.msra.mxu0 %v1846
    %2309 = vmatprep.subr.bf16.mxu0 0
    %2310 = vmatpush1.bf16.msra.mxu0 %v1845
    %2311 = vmatprep.subr.bf16.mxu0 0
    %2312 = vmatpush1.bf16.msra.mxu0 %v1844
    %2313 = vmatprep.subr.bf16.mxu0 0
    %2314 = vmatpush1.bf16.msra.mxu0 %v1843
    %2315 = vmatprep.subr.bf16.mxu0 0
    %2316 = vmatpush1.bf16.msra.mxu0 %v1842
    %2317 = vmatprep.subr.bf16.mxu0 0
    %2318 = vmatpush2.bf16.msra.mxu0 %v1857
    %2319 = vmatprep.subr.bf16.mxu0 0
    %2320 = vmatpush2.bf16.msra.mxu0 %v1856
    %2321 = vmatprep.subr.bf16.mxu0 0
    %2322 = vmatpush2.bf16.msra.mxu0 %v1855
    %2323 = vmatprep.subr.bf16.mxu0 0
    %2324 = vmatpush2.bf16.msra.mxu0 %v1854
    %2325 = vmatprep.subr.bf16.mxu0 0
    %2326 = vmatpush2.bf16.msra.mxu0 %v1853
    %2327 = vmatprep.subr.bf16.mxu0 0
    %2328 = vmatpush2.bf16.msra.mxu0 %v1852
    %2329 = vmatprep.subr.bf16.mxu0 0
    %2330 = vmatpush2.bf16.msra.mxu0 %v1851
    %2331 = vmatprep.subr.bf16.mxu0 0
    %2332 = vmatpush2.bf16.msra.mxu0 %v1850
    %2333 = vmatprep.mubr.bf16.mxu0 %v618
    %2334 = vmatmul.mubr.bf16.gmra.mxu0 %v617
    %v2335 = vpop.f32.mrf.mxu0
    %v2336 = vadd.f32 %v2295, %v2335
    %v2337 = vpop.f32.mrf.mxu0
    %v2338 = vpop.f32.mrf.mxu0
    %v2339 = vadd.f32 %v2298, %v2338
    %v2340 = vpop.f32.mrf.mxu0
    %2341 = vdwg.mxu0
    %2342 = vmatprep.subr.bf16.mxu0 0
    %2343 = vmatpush1.bf16.msra.mxu0 %v1865
    %2344 = vmatprep.subr.bf16.mxu0 0
    %2345 = vmatpush1.bf16.msra.mxu0 %v1864
    %2346 = vmatprep.subr.bf16.mxu0 0
    %2347 = vmatpush1.bf16.msra.mxu0 %v1863
    %2348 = vmatprep.subr.bf16.mxu0 0
    %2349 = vmatpush1.bf16.msra.mxu0 %v1862
    %2350 = vmatprep.subr.bf16.mxu0 0
    %2351 = vmatpush1.bf16.msra.mxu0 %v1861
    %2352 = vmatprep.subr.bf16.mxu0 0
    %2353 = vmatpush1.bf16.msra.mxu0 %v1860
    %2354 = vmatprep.subr.bf16.mxu0 0
    %2355 = vmatpush1.bf16.msra.mxu0 %v1859
    %2356 = vmatprep.subr.bf16.mxu0 0
    %2357 = vmatpush1.bf16.msra.mxu0 %v1858
    %2358 = vmatprep.subr.bf16.mxu0 0
    %2359 = vmatpush2.bf16.msra.mxu0 %v1873
    %2360 = vmatprep.subr.bf16.mxu0 0
    %2361 = vmatpush2.bf16.msra.mxu0 %v1872
    %2362 = vmatprep.subr.bf16.mxu0 0
    %2363 = vmatpush2.bf16.msra.mxu0 %v1871
    %2364 = vmatprep.subr.bf16.mxu0 0
    %2365 = vmatpush2.bf16.msra.mxu0 %v1870
    %2366 = vmatprep.subr.bf16.mxu0 0
    %2367 = vmatpush2.bf16.msra.mxu0 %v1869
    %2368 = vmatprep.subr.bf16.mxu0 0
    %2369 = vmatpush2.bf16.msra.mxu0 %v1868
    %2370 = vmatprep.subr.bf16.mxu0 0
    %2371 = vmatpush2.bf16.msra.mxu0 %v1867
    %2372 = vmatprep.subr.bf16.mxu0 0
    %2373 = vmatpush2.bf16.msra.mxu0 %v1866
    %2374 = vmatprep.mubr.bf16.mxu0 %v620
    %2375 = vmatmul.mubr.bf16.gmra.mxu0 %v619
    %v2376 = vpop.f32.mrf.mxu0
    %v2377 = vadd.f32 %v2336, %v2376
    %v2378 = vpop.f32.mrf.mxu0
    %v2379 = vpop.f32.mrf.mxu0
    %v2380 = vadd.f32 %v2339, %v2379
    %v2381 = vpop.f32.mrf.mxu0
    %2382 = vdwg.mxu0
    %2383 = vmatprep.subr.bf16.mxu0 0
    %2384 = vmatpush1.bf16.msra.mxu0 %v1881
    %2385 = vmatprep.subr.bf16.mxu0 0
    %2386 = vmatpush1.bf16.msra.mxu0 %v1880
    %2387 = vmatprep.subr.bf16.mxu0 0
    %2388 = vmatpush1.bf16.msra.mxu0 %v1879
    %2389 = vmatprep.subr.bf16.mxu0 0
    %2390 = vmatpush1.bf16.msra.mxu0 %v1878
    %2391 = vmatprep.subr.bf16.mxu0 0
    %2392 = vmatpush1.bf16.msra.mxu0 %v1877
    %2393 = vmatprep.subr.bf16.mxu0 0
    %2394 = vmatpush1.bf16.msra.mxu0 %v1876
    %2395 = vmatprep.subr.bf16.mxu0 0
    %2396 = vmatpush1.bf16.msra.mxu0 %v1875
    %2397 = vmatprep.subr.bf16.mxu0 0
    %2398 = vmatpush1.bf16.msra.mxu0 %v1874
    %2399 = vmatprep.subr.bf16.mxu0 0
    %2400 = vmatpush2.bf16.msra.mxu0 %v1889
    %2401 = vmatprep.subr.bf16.mxu0 0
    %2402 = vmatpush2.bf16.msra.mxu0 %v1888
    %2403 = vmatprep.subr.bf16.mxu0 0
    %2404 = vmatpush2.bf16.msra.mxu0 %v1887
    %2405 = vmatprep.subr.bf16.mxu0 0
    %2406 = vmatpush2.bf16.msra.mxu0 %v1886
    %2407 = vmatprep.subr.bf16.mxu0 0
    %2408 = vmatpush2.bf16.msra.mxu0 %v1885
    %2409 = vmatprep.subr.bf16.mxu0 0
    %2410 = vmatpush2.bf16.msra.mxu0 %v1884
    %2411 = vmatprep.subr.bf16.mxu0 0
    %2412 = vmatpush2.bf16.msra.mxu0 %v1883
    %2413 = vmatprep.subr.bf16.mxu0 0
    %2414 = vmatpush2.bf16.msra.mxu0 %v1882
    %2415 = vmatprep.mubr.bf16.mxu0 %v622
    %2416 = vmatmul.mubr.bf16.gmra.mxu0 %v621
    %v2417 = vpop.f32.mrf.mxu0
    %v2418 = vadd.f32 %v2377, %v2417
    %v2419 = vpop.f32.mrf.mxu0
    %v2420 = vpop.f32.mrf.mxu0
    %v2421 = vadd.f32 %v2380, %v2420
    %v2422 = vpop.f32.mrf.mxu0
    %2423 = vdwg.mxu0
    %2424 = vmatprep.subr.bf16.mxu0 0
    %2425 = vmatpush1.bf16.msra.mxu0 %v1897
    %2426 = vmatprep.subr.bf16.mxu0 0
    %2427 = vmatpush1.bf16.msra.mxu0 %v1896
    %2428 = vmatprep.subr.bf16.mxu0 0
    %2429 = vmatpush1.bf16.msra.mxu0 %v1895
    %2430 = vmatprep.subr.bf16.mxu0 0
    %2431 = vmatpush1.bf16.msra.mxu0 %v1894
    %2432 = vmatprep.subr.bf16.mxu0 0
    %2433 = vmatpush1.bf16.msra.mxu0 %v1893
    %2434 = vmatprep.subr.bf16.mxu0 0
    %2435 = vmatpush1.bf16.msra.mxu0 %v1892
    %2436 = vmatprep.subr.bf16.mxu0 0
    %2437 = vmatpush1.bf16.msra.mxu0 %v1891
    %2438 = vmatprep.subr.bf16.mxu0 0
    %2439 = vmatpush1.bf16.msra.mxu0 %v1890
    %2440 = vmatprep.subr.bf16.mxu0 0
    %2441 = vmatpush2.bf16.msra.mxu0 %v1905
    %2442 = vmatprep.subr.bf16.mxu0 0
    %2443 = vmatpush2.bf16.msra.mxu0 %v1904
    %2444 = vmatprep.subr.bf16.mxu0 0
    %2445 = vmatpush2.bf16.msra.mxu0 %v1903
    %2446 = vmatprep.subr.bf16.mxu0 0
    %2447 = vmatpush2.bf16.msra.mxu0 %v1902
    %2448 = vmatprep.subr.bf16.mxu0 0
    %2449 = vmatpush2.bf16.msra.mxu0 %v1901
    %2450 = vmatprep.subr.bf16.mxu0 0
    %2451 = vmatpush2.bf16.msra.mxu0 %v1900
    %2452 = vmatprep.subr.bf16.mxu0 0
    %2453 = vmatpush2.bf16.msra.mxu0 %v1899
    %2454 = vmatprep.subr.bf16.mxu0 0
    %2455 = vmatpush2.bf16.msra.mxu0 %v1898
    %2456 = vmatprep.mubr.bf16.mxu0 %v624
    %2457 = vmatmul.mubr.bf16.gmra.mxu0 %v623
    %v2458 = vpop.f32.mrf.mxu0
    %v2459 = vadd.f32 %v2418, %v2458
    %v2460 = vpop.f32.mrf.mxu0
    %v2461 = vpop.f32.mrf.mxu0
    %v2462 = vadd.f32 %v2421, %v2461
    %v2463 = vpop.f32.mrf.mxu0
    %2464 = vdwg.mxu0
    %2465 = vmatprep.subr.bf16.mxu0 0
    %2466 = vmatpush1.bf16.msra.mxu0 %v1913
    %2467 = vmatprep.subr.bf16.mxu0 0
    %2468 = vmatpush1.bf16.msra.mxu0 %v1912
    %2469 = vmatprep.subr.bf16.mxu0 0
    %2470 = vmatpush1.bf16.msra.mxu0 %v1911
    %2471 = vmatprep.subr.bf16.mxu0 0
    %2472 = vmatpush1.bf16.msra.mxu0 %v1910
    %2473 = vmatprep.subr.bf16.mxu0 0
    %2474 = vmatpush1.bf16.msra.mxu0 %v1909
    %2475 = vmatprep.subr.bf16.mxu0 0
    %2476 = vmatpush1.bf16.msra.mxu0 %v1908
    %2477 = vmatprep.subr.bf16.mxu0 0
    %2478 = vmatpush1.bf16.msra.mxu0 %v1907
    %2479 = vmatprep.subr.bf16.mxu0 0
    %2480 = vmatpush1.bf16.msra.mxu0 %v1906
    %2481 = vmatprep.subr.bf16.mxu0 0
    %2482 = vmatpush2.bf16.msra.mxu0 %v1921
    %2483 = vmatprep.subr.bf16.mxu0 0
    %2484 = vmatpush2.bf16.msra.mxu0 %v1920
    %2485 = vmatprep.subr.bf16.mxu0 0
    %2486 = vmatpush2.bf16.msra.mxu0 %v1919
    %2487 = vmatprep.subr.bf16.mxu0 0
    %2488 = vmatpush2.bf16.msra.mxu0 %v1918
    %2489 = vmatprep.subr.bf16.mxu0 0
    %2490 = vmatpush2.bf16.msra.mxu0 %v1917
    %2491 = vmatprep.subr.bf16.mxu0 0
    %2492 = vmatpush2.bf16.msra.mxu0 %v1916
    %2493 = vmatprep.subr.bf16.mxu0 0
    %2494 = vmatpush2.bf16.msra.mxu0 %v1915
    %2495 = vmatprep.subr.bf16.mxu0 0
    %2496 = vmatpush2.bf16.msra.mxu0 %v1914
    %2497 = vmatprep.mubr.bf16.mxu0 %v626
    %2498 = vmatmul.mubr.bf16.gmra.mxu0 %v625
    %v2499 = vpop.f32.mrf.mxu0
    %v2500 = vadd.f32 %v2459, %v2499
    %v2501 = vpop.f32.mrf.mxu0
    %v2502 = vpop.f32.mrf.mxu0
    %v2503 = vadd.f32 %v2462, %v2502
    %v2504 = vpop.f32.mrf.mxu0
    %2505 = vdwg.mxu0
    %2506 = vmatprep.subr.bf16.mxu0 0
    %2507 = vmatpush1.bf16.msra.mxu0 %v1929
    %2508 = vmatprep.subr.bf16.mxu0 0
    %2509 = vmatpush1.bf16.msra.mxu0 %v1928
    %2510 = vmatprep.subr.bf16.mxu0 0
    %2511 = vmatpush1.bf16.msra.mxu0 %v1927
    %2512 = vmatprep.subr.bf16.mxu0 0
    %2513 = vmatpush1.bf16.msra.mxu0 %v1926
    %2514 = vmatprep.subr.bf16.mxu0 0
    %2515 = vmatpush1.bf16.msra.mxu0 %v1925
    %2516 = vmatprep.subr.bf16.mxu0 0
    %2517 = vmatpush1.bf16.msra.mxu0 %v1924
    %2518 = vmatprep.subr.bf16.mxu0 0
    %2519 = vmatpush1.bf16.msra.mxu0 %v1923
    %2520 = vmatprep.subr.bf16.mxu0 0
    %2521 = vmatpush1.bf16.msra.mxu0 %v1922
    %2522 = vmatprep.subr.bf16.mxu0 0
    %2523 = vmatpush2.bf16.msra.mxu0 %v1937
    %2524 = vmatprep.subr.bf16.mxu0 0
    %2525 = vmatpush2.bf16.msra.mxu0 %v1936
    %2526 = vmatprep.subr.bf16.mxu0 0
    %2527 = vmatpush2.bf16.msra.mxu0 %v1935
    %2528 = vmatprep.subr.bf16.mxu0 0
    %2529 = vmatpush2.bf16.msra.mxu0 %v1934
    %2530 = vmatprep.subr.bf16.mxu0 0
    %2531 = vmatpush2.bf16.msra.mxu0 %v1933
    %2532 = vmatprep.subr.bf16.mxu0 0
    %2533 = vmatpush2.bf16.msra.mxu0 %v1932
    %2534 = vmatprep.subr.bf16.mxu0 0
    %2535 = vmatpush2.bf16.msra.mxu0 %v1931
    %2536 = vmatprep.subr.bf16.mxu0 0
    %2537 = vmatpush2.bf16.msra.mxu0 %v1930
    %2538 = vmatprep.mubr.bf16.mxu0 %v628
    %2539 = vmatmul.mubr.bf16.gmra.mxu0 %v627
    %v2540 = vpop.f32.mrf.mxu0
    %v2541 = vadd.f32 %v2500, %v2540
    %v2542 = vpop.f32.mrf.mxu0
    %v2543 = vpop.f32.mrf.mxu0
    %v2544 = vadd.f32 %v2503, %v2543
    %v2545 = vpop.f32.mrf.mxu0
    %2546 = vdwg.mxu0
    %2547 = vmatprep.subr.bf16.mxu0 0
    %2548 = vmatpush1.bf16.msra.mxu0 %v1945
    %2549 = vmatprep.subr.bf16.mxu0 0
    %2550 = vmatpush1.bf16.msra.mxu0 %v1944
    %2551 = vmatprep.subr.bf16.mxu0 0
    %2552 = vmatpush1.bf16.msra.mxu0 %v1943
    %2553 = vmatprep.subr.bf16.mxu0 0
    %2554 = vmatpush1.bf16.msra.mxu0 %v1942
    %2555 = vmatprep.subr.bf16.mxu0 0
    %2556 = vmatpush1.bf16.msra.mxu0 %v1941
    %2557 = vmatprep.subr.bf16.mxu0 0
    %2558 = vmatpush1.bf16.msra.mxu0 %v1940
    %2559 = vmatprep.subr.bf16.mxu0 0
    %2560 = vmatpush1.bf16.msra.mxu0 %v1939
    %2561 = vmatprep.subr.bf16.mxu0 0
    %2562 = vmatpush1.bf16.msra.mxu0 %v1938
    %2563 = vmatprep.subr.bf16.mxu0 0
    %2564 = vmatpush2.bf16.msra.mxu0 %v1953
    %2565 = vmatprep.subr.bf16.mxu0 0
    %2566 = vmatpush2.bf16.msra.mxu0 %v1952
    %2567 = vmatprep.subr.bf16.mxu0 0
    %2568 = vmatpush2.bf16.msra.mxu0 %v1951
    %2569 = vmatprep.subr.bf16.mxu0 0
    %2570 = vmatpush2.bf16.msra.mxu0 %v1950
    %2571 = vmatprep.subr.bf16.mxu0 0
    %2572 = vmatpush2.bf16.msra.mxu0 %v1949
    %2573 = vmatprep.subr.bf16.mxu0 0
    %2574 = vmatpush2.bf16.msra.mxu0 %v1948
    %2575 = vmatprep.subr.bf16.mxu0 0
    %2576 = vmatpush2.bf16.msra.mxu0 %v1947
    %2577 = vmatprep.subr.bf16.mxu0 0
    %2578 = vmatpush2.bf16.msra.mxu0 %v1946
    %2579 = vmatprep.mubr.bf16.mxu0 %v630
    %2580 = vmatmul.mubr.bf16.gmra.mxu0 %v629
    %v2581 = vpop.f32.mrf.mxu0
    %v2582 = vadd.f32 %v2541, %v2581
    %v2583 = vpop.f32.mrf.mxu0
    %v2584 = vpop.f32.mrf.mxu0
    %v2585 = vadd.f32 %v2544, %v2584
    %v2586 = vpop.f32.mrf.mxu0
    %2587 = vdwg.mxu0
    %2588 = vmatprep.subr.bf16.mxu0 0
    %2589 = vmatpush1.bf16.msra.mxu0 %v1961
    %2590 = vmatprep.subr.bf16.mxu0 0
    %2591 = vmatpush1.bf16.msra.mxu0 %v1960
    %2592 = vmatprep.subr.bf16.mxu0 0
    %2593 = vmatpush1.bf16.msra.mxu0 %v1959
    %2594 = vmatprep.subr.bf16.mxu0 0
    %2595 = vmatpush1.bf16.msra.mxu0 %v1958
    %2596 = vmatprep.subr.bf16.mxu0 0
    %2597 = vmatpush1.bf16.msra.mxu0 %v1957
    %2598 = vmatprep.subr.bf16.mxu0 0
    %2599 = vmatpush1.bf16.msra.mxu0 %v1956
    %2600 = vmatprep.subr.bf16.mxu0 0
    %2601 = vmatpush1.bf16.msra.mxu0 %v1955
    %2602 = vmatprep.subr.bf16.mxu0 0
    %2603 = vmatpush1.bf16.msra.mxu0 %v1954
    %2604 = vmatprep.subr.bf16.mxu0 0
    %2605 = vmatpush2.bf16.msra.mxu0 %v1969
    %2606 = vmatprep.subr.bf16.mxu0 0
    %2607 = vmatpush2.bf16.msra.mxu0 %v1968
    %2608 = vmatprep.subr.bf16.mxu0 0
    %2609 = vmatpush2.bf16.msra.mxu0 %v1967
    %2610 = vmatprep.subr.bf16.mxu0 0
    %2611 = vmatpush2.bf16.msra.mxu0 %v1966
    %2612 = vmatprep.subr.bf16.mxu0 0
    %2613 = vmatpush2.bf16.msra.mxu0 %v1965
    %2614 = vmatprep.subr.bf16.mxu0 0
    %2615 = vmatpush2.bf16.msra.mxu0 %v1964
    %2616 = vmatprep.subr.bf16.mxu0 0
    %2617 = vmatpush2.bf16.msra.mxu0 %v1963
    %2618 = vmatprep.subr.bf16.mxu0 0
    %2619 = vmatpush2.bf16.msra.mxu0 %v1962
    %2620 = vmatprep.mubr.bf16.mxu0 %v632
    %2621 = vmatmul.mubr.bf16.gmra.mxu0 %v631
    %v2622 = vpop.f32.mrf.mxu0
    %v2623 = vadd.f32 %v2582, %v2622
    %v2624 = vpop.f32.mrf.mxu0
    %v2625 = vpop.f32.mrf.mxu0
    %v2626 = vadd.f32 %v2585, %v2625
    %v2627 = vpop.f32.mrf.mxu0
    %2628 = vdwg.mxu0
    %2629 = vmatprep.subr.bf16.mxu0 0
    %2630 = vmatpush1.bf16.msra.mxu0 %v1977
    %2631 = vmatprep.subr.bf16.mxu0 0
    %2632 = vmatpush1.bf16.msra.mxu0 %v1976
    %2633 = vmatprep.subr.bf16.mxu0 0
    %2634 = vmatpush1.bf16.msra.mxu0 %v1975
    %2635 = vmatprep.subr.bf16.mxu0 0
    %2636 = vmatpush1.bf16.msra.mxu0 %v1974
    %2637 = vmatprep.subr.bf16.mxu0 0
    %2638 = vmatpush1.bf16.msra.mxu0 %v1973
    %2639 = vmatprep.subr.bf16.mxu0 0
    %2640 = vmatpush1.bf16.msra.mxu0 %v1972
    %2641 = vmatprep.subr.bf16.mxu0 0
    %2642 = vmatpush1.bf16.msra.mxu0 %v1971
    %2643 = vmatprep.subr.bf16.mxu0 0
    %2644 = vmatpush1.bf16.msra.mxu0 %v1970
    %2645 = vmatprep.subr.bf16.mxu0 0
    %2646 = vmatpush2.bf16.msra.mxu0 %v1985
    %2647 = vmatprep.subr.bf16.mxu0 0
    %2648 = vmatpush2.bf16.msra.mxu0 %v1984
    %2649 = vmatprep.subr.bf16.mxu0 0
    %2650 = vmatpush2.bf16.msra.mxu0 %v1983
    %2651 = vmatprep.subr.bf16.mxu0 0
    %2652 = vmatpush2.bf16.msra.mxu0 %v1982
    %2653 = vmatprep.subr.bf16.mxu0 0
    %2654 = vmatpush2.bf16.msra.mxu0 %v1981
    %2655 = vmatprep.subr.bf16.mxu0 0
    %2656 = vmatpush2.bf16.msra.mxu0 %v1980
    %2657 = vmatprep.subr.bf16.mxu0 0
    %2658 = vmatpush2.bf16.msra.mxu0 %v1979
    %2659 = vmatprep.subr.bf16.mxu0 0
    %2660 = vmatpush2.bf16.msra.mxu0 %v1978
    %2661 = vmatprep.mubr.bf16.mxu0 %v634
    %2662 = vmatmul.mubr.bf16.gmra.mxu0 %v633
    %v2663 = vpop.f32.mrf.mxu0
    %v2664 = vadd.f32 %v2623, %v2663
    %v2665 = vpop.f32.mrf.mxu0
    %v2666 = vpop.f32.mrf.mxu0
    %v2667 = vadd.f32 %v2626, %v2666
    %v2668 = vpop.f32.mrf.mxu0
    %2669 = vdwg.mxu0
    %v2670 = vmax.f32 %v2664, 0.0
    %v2671 = vmax.f32 %v2667, 0.0
    %v2672 = vpack.c.bf16 %v2671, %v2670
    %v2673 = vld [vmem:[%s3] sm:$0xf]
    %v2674 = vld [vmem:[%s3 + $0x4] sm:$0xf]
    %v2675 = vld [vmem:[%s3 + $0x8] sm:$0xf]
    %v2676 = vld [vmem:[%s3 + $0xc] sm:$0xf]
    %v2677 = vld [vmem:[%s3 + $0x10] sm:$0xf]
    %v2678 = vld [vmem:[%s3 + $0x14] sm:$0xf]
    %v2679 = vld [vmem:[%s3 + $0x18] sm:$0xf]
    %v2680 = vld [vmem:[%s3 + $0x1c] sm:$0xf]
    %v2681 = vld [vmem:[%s3 + $0x20] sm:$0xf]
    %v2682 = vld [vmem:[%s3 + $0x24] sm:$0xf]
    %v2683 = vld [vmem:[%s3 + $0x28] sm:$0xf]
    %v2684 = vld [vmem:[%s3 + $0x2c] sm:$0xf]
    %v2685 = vld [vmem:[%s3 + $0x30] sm:$0xf]
    %v2686 = vld [vmem:[%s3 + $0x34] sm:$0xf]
    %v2687 = vld [vmem:[%s3 + $0x38] sm:$0xf]
    %v2688 = vld [vmem:[%s3 + $0x3c] sm:$0xf]
    %v2689 = vld [vmem:[%s4] sm:$0x1]
    %v2691 = vlaneseq
    %v2692 = vshrl.u32 %v2691, 7
    %v2693 = vsub.s32 0, %v2692
    %v2694 = vrot.slane %v2689, %v2693
    %v2712 = vunpack.c.l.b16 %v2673
    %v2713 = vunpack.c.l.b16 %v2674
    %v2714 = vunpack.c.l.b16 %v2675
    %v2715 = vunpack.c.l.b16 %v2676
    %v2716 = vunpack.c.l.b16 %v2677
    %v2717 = vunpack.c.l.b16 %v2678
    %v2718 = vunpack.c.l.b16 %v2679
    %v2719 = vunpack.c.l.b16 %v2680
    %v2720 = vunpack.c.l.b16 %v2681
    %v2721 = vunpack.c.l.b16 %v2682
    %v2722 = vunpack.c.l.b16 %v2683
    %v2723 = vunpack.c.l.b16 %v2684
    %v2724 = vunpack.c.l.b16 %v2685
    %v2725 = vunpack.c.l.b16 %v2686
    %v2726 = vunpack.c.l.b16 %v2687
    %v2727 = vunpack.c.l.b16 %v2688
    %v2728 = vpack.c.b16 %v2713, %v2712
    %v2729 = vpack.c.b16 %v2715, %v2714
    %v2730 = vpack.c.b16 %v2717, %v2716
    %v2731 = vpack.c.b16 %v2719, %v2718
    %v2732 = vpack.c.b16 %v2721, %v2720
    %v2733 = vpack.c.b16 %v2723, %v2722
    %v2734 = vpack.c.b16 %v2725, %v2724
    %v2735 = vpack.c.b16 %v2727, %v2726
    %2744 = vmatprep.subr.bf16.mxu0 0
    %2745 = vmatpush1.bf16.msra.mxu0 %v2735
    %2746 = vmatprep.subr.bf16.mxu0 0
    %2747 = vmatpush1.bf16.msra.mxu0 %v2734
    %2748 = vmatprep.subr.bf16.mxu0 0
    %2749 = vmatpush1.bf16.msra.mxu0 %v2733
    %2750 = vmatprep.subr.bf16.mxu0 0
    %2751 = vmatpush1.bf16.msra.mxu0 %v2732
    %2752 = vmatprep.subr.bf16.mxu0 0
    %2753 = vmatpush1.bf16.msra.mxu0 %v2731
    %2754 = vmatprep.subr.bf16.mxu0 0
    %2755 = vmatpush1.bf16.msra.mxu0 %v2730
    %2756 = vmatprep.subr.bf16.mxu0 0
    %2757 = vmatpush1.bf16.msra.mxu0 %v2729
    %2758 = vmatprep.subr.bf16.mxu0 0
    %2759 = vmatpush1.bf16.msra.mxu0 %v2728
    %2760 = vmatprep.subr.bf16.mxu0 0
    %2761 = vmatpush2.bf16.msra.mxu0 0
    %2762 = vmatprep.subr.bf16.mxu0 0
    %2763 = vmatpush2.bf16.msra.mxu0 0
    %2764 = vmatprep.subr.bf16.mxu0 0
    %2765 = vmatpush2.bf16.msra.mxu0 0
    %2766 = vmatprep.subr.bf16.mxu0 0
    %2767 = vmatpush2.bf16.msra.mxu0 0
    %2768 = vmatprep.subr.bf16.mxu0 0
    %2769 = vmatpush2.bf16.msra.mxu0 0
    %2770 = vmatprep.subr.bf16.mxu0 0
    %2771 = vmatpush2.bf16.msra.mxu0 0
    %2772 = vmatprep.subr.bf16.mxu0 0
    %2773 = vmatpush2.bf16.msra.mxu0 0
    %2774 = vmatprep.subr.bf16.mxu0 0
    %2775 = vmatpush2.bf16.msra.mxu0 0
    %2776 = vmatprep.mubr.bf16.mxu0 0
    %2777 = vmatmul.mubr.bf16.gmra.mxu0 %v2672
    %v2778 = vpop.f32.mrf.mxu0
    %v2779 = vadd.f32 %v2694, %v2778
    %v2780 = vpop.f32.mrf.mxu0
    %v2781 = vpop.f32.mrf.mxu0
    %v2782 = vadd.f32 %v2694, %v2781
    %v2783 = vpop.f32.mrf.mxu0
    %2784 = vdwg.mxu0
    %v2785 = vpack.c.bf16 %v2782, %v2779
    %v2787 = vunpack.c.l.b16 %v2785
    %v2788 = vunpack.c.h.b16 %v2785
    %v2789 = vpack.c.b16 %v2787, %v2787
    %v2790 = vpack.c.b16 %v2788, %v2788
    %2793 = vst [vmem:[%s5] sm:$0xf] %v2789
    %2794 = vst [vmem:[%s5 + $0x4] sm:$0xf] %v2790
    // Predicated region
    $region26: #{mlp_classifier_forward.1} parent=1 // pred_check
      _
    $region27: #{mlp_classifier_forward.1} parent=1 // pred_check_branch
      %2796 = sbr.rel (0) target = $region29
    $region28: #{mlp_classifier_forward.1} parent=1 // pred_region
      _
    $region29: #{mlp_classifier_forward.1} parent=1 // pred_fallthru
      _
    // Predicated region
    $region30: #{mlp_classifier_forward.1} parent=1 // pred_check
      _
    $region31: #{mlp_classifier_forward.1} parent=1 // pred_check_branch
      %2798 = sbr.rel (0) target = $region33
    $region32: #{mlp_classifier_forward.1} parent=1 // pred_region
      _
    $region33: #{mlp_classifier_forward.1} parent=1 // pred_fallthru
      _
    %2799 = vsyncpa [#allocation3], 1

</llo_original>
